<compile_context>
chip_gen: v7x
topology: tpu7x:2x2x1
jax: 0.10.0
libtpu: 0.0.40
codegen_flags: <defaults>
</compile_context>

<pallas_src>
import functools

import jax
import jax.numpy as jnp
from jax import lax
from jax.experimental import pallas as pl
from jax.experimental.pallas import tpu as pltpu

EPS = 1e-5


# ----------------------------------------------------------------------------
# In-kernel helpers
# ----------------------------------------------------------------------------
def _conv3x3_im2col(pad_ref, slab_ref, act, w, masks, *, H, W, Nb, Ppad):
    """3x3 'same' conv over Nb lane-folded images as ONE im2col matmul.

    pad_ref:  VMEM scratch (C, Ppad + Nb*(HW+Ppad)) — flat zero-halo rows,
              one segment per image (adjacent images share a halo region).
    slab_ref: VMEM scratch (9*C, Nb*HW)             — im2col slab.
    act:      (C, Nb*HW) float32 (already BN+ReLU'd), image-major lanes.
    w:        (Mout, 9*C), taps in (dy, dx) row-major order, channel minor.
    masks:    (valid_dx0, valid_dx2) column-wrap masks of shape (1, HW).
    Returns:  (Mout, Nb*HW) float32.
    """
    C = act.shape[0]
    HW = H * W
    pitch = HW + Ppad                    # per-image pitch in the halo buffer
    m_dx0, m_dx2 = masks

    # Zero only the halos; interiors are fully rewritten every grid step.
    zero_halo = jnp.zeros((C, Ppad), jnp.float32)
    pad_ref[:, :Ppad] = zero_halo                          # leading halo
    for i in range(Nb):
        base = Ppad + i * pitch
        pad_ref[:, base:base + HW] = act[:, i * HW:(i + 1) * HW]
        pad_ref[:, base + HW:base + HW + Ppad] = zero_halo  # trailing halo
        # (trailing halo of image i == leading halo of image i+1)

    # Center tap (dy=dx=1): act is already in vregs and lane-aligned —
    # one store covering all images.
    slab_ref[4 * C:5 * C, :] = act

    # Remaining 8 taps: lane-offset slices of the halo buffer + wrap masks.
    for dy in range(3):
        for dx in range(3):
            if dy == 1 and dx == 1:
                continue
            k = dy * 3 + dx
            off = (dy - 1) * W + (dx - 1)
            for i in range(Nb):
                base = Ppad + i * pitch
                t = pad_ref[:, base + off:base + off + HW]   # (C, HW)
                if dx == 0:
                    t = t * m_dx0            # source col = x - 1 (wrap kill)
                elif dx == 2:
                    t = t * m_dx2            # source col = x + 1 (wrap kill)
                slab_ref[k * C:(k + 1) * C, i * HW:(i + 1) * HW] = t

    # One MXU matmul: (Mout, 9*C) @ (9*C, Nb*HW), lane-dense output.
    return jnp.dot(w, slab_ref[...], preferred_element_type=jnp.float32)


def basic_block_kernel(x_ref, vec_ref, w1_ref, w2_ref, mask_ref,
                       o_ref,
                       pad1_ref, slab1_ref, pad2_ref, slab2_ref,
                       *, H, W, Nb, Cin, Cout, Ppad):
    m_dx0 = mask_ref[0:1, :]                      # (1, HW)
    m_dx2 = mask_ref[1:2, :]
    masks = (m_dx0, m_dx2)

    # Packed per-channel constants: [scale1, shift1, shift2', bias_out].
    s1 = vec_ref[:Cin, 0:1]
    t1 = vec_ref[:Cin, 1:2]
    t2 = vec_ref[:Cout, 2:3]
    bo = vec_ref[:Cout, 3:4]

    x = x_ref[0].astype(jnp.float32)                       # (Cin, Nb*HW)
    act1 = jnp.maximum(x * s1 + t1, 0.0)                   # bn1 + relu (shared)

    # conv1 (bn2 scale folded) AND the shortcut 1x1 conv in ONE MXU matmul.
    hsc = _conv3x3_im2col(pad1_ref, slab1_ref, act1, w1_ref[...], masks,
                          H=H, W=W, Nb=Nb, Ppad=Ppad)      # (2*Cout, Nb*HW)
    h = hsc[:Cout, :]
    sc = hsc[Cout:, :]

    act2 = jnp.maximum(h + t2, 0.0)                        # bn2 + relu
    c2 = _conv3x3_im2col(pad2_ref, slab2_ref, act2, w2_ref[...], masks,
                         H=H, W=W, Nb=Nb, Ppad=Ppad)       # survival folded

    o_ref[0] = (sc + c2 + bo).astype(o_ref.dtype)          # residual add


# ----------------------------------------------------------------------------
# Wrapper: one fused pallas_call, grid over lane-folded image groups.
# ----------------------------------------------------------------------------
def basic_block_forward(x_nchw, p, survival, images_per_step=None):
    N, Cin, H, W = x_nchw.shape
    HW = H * W
    Cout = p["w1_hwio"].shape[-1]

    Cin_p = ((Cin + 7) // 8) * 8                 # pad channels to 8-sublane tiles
    Ppad = ((W + 1 + 127) // 128) * 128          # 128-aligned halo >= W+1

    if images_per_step is None:
        # Fold enough images per step to reach >= 512 lanes on the matmul RHS.
        images_per_step = min(N, max(1, 512 // HW))
    Nb = max(1, images_per_step)
    n_groups = -(-N // Nb)
    N_pad = n_groups * Nb

    # Fold eval-mode BatchNorm (running stats) into per-channel scale/shift.
    scale1 = p["bn1_gamma"] / jnp.sqrt(p["bn1_var"] + EPS)
    shift1 = p["bn1_beta"] - p["bn1_mean"] * scale1
    scale2 = p["bn2_gamma"] / jnp.sqrt(p["bn2_var"] + EPS)
    shift2 = p["bn2_beta"] - p["bn2_mean"] * scale2

    # Packed per-channel constants: [scale1, shift1, shift2+scale2*b1, bsc+surv*b2].
    Cp = max(Cin_p, Cout)
    shift2p = shift2 + scale2 * p["b1"]
    bias_out = p["bsc"] + jnp.float32(survival) * p["b2"]
    vec = jnp.zeros((Cp, 4), jnp.float32)
    vec = vec.at[:Cin, 0].set(scale1)
    vec = vec.at[:Cin, 1].set(shift1)
    vec = vec.at[:Cout, 2].set(shift2p)
    vec = vec.at[:Cout, 3].set(bias_out)

    # conv1 weights as (Cout, 9*Cin_p) im2col matrix (bn2 scale folded),
    # augmented with the shortcut 1x1 weights at the center-tap columns.
    w1 = jnp.zeros((3, 3, Cin_p, Cout), jnp.float32)
    w1 = w1.at[:, :, :Cin, :].set(p["w1_hwio"])
    w1 = w1.reshape(9 * Cin_p, Cout).T * scale2[:, None]        # (Cout, 9*Cin_p)
    w1_aug = jnp.zeros((2 * Cout, 9 * Cin_p), jnp.float32)
    w1_aug = w1_aug.at[:Cout, :].set(w1)
    w1_aug = w1_aug.at[Cout:, 4 * Cin_p:4 * Cin_p + Cin].set(p["wsc"].T)

    # conv2 weights with survival folded in.
    w2 = p["w2_hwio"].reshape(9 * Cout, Cout).T * jnp.float32(survival)

    # Column-wrap validity masks (dx = 0 / dx = 2), computed once.
    col = jnp.arange(HW, dtype=jnp.int32) % W
    masks = jnp.stack([col >= 1, col <= W - 2]).astype(jnp.float32)   # (2, HW)

    # Activations: (N,C,H,W) -> pad batch/channels -> lane-folded groups.
    x = x_nchw.reshape(N, Cin, HW)
    x = jnp.pad(x, ((0, N_pad - N), (0, Cin_p - Cin), (0, 0)))
    x = x.reshape(n_groups, Nb, Cin_p, HW).transpose(0, 2, 1, 3)
    x = x.reshape(n_groups, Cin_p, Nb * HW)

    rep2 = lambda g: (0, 0)  # parameters are shared by every grid step
    kernel = functools.partial(basic_block_kernel, H=H, W=W, Nb=Nb,
                               Cin=Cin_p, Cout=Cout, Ppad=Ppad)
    pad_width = Ppad + Nb * (HW + Ppad)

    out = pl.pallas_call(
        kernel,
        out_shape=jax.ShapeDtypeStruct((n_groups, Cout, Nb * HW), x_nchw.dtype),
        grid=(n_groups,),
        in_specs=[
            pl.BlockSpec((1, Cin_p, Nb * HW), lambda g: (g, 0, 0)),
            pl.BlockSpec((Cp, 4), rep2),
            pl.BlockSpec((2 * Cout, 9 * Cin_p), rep2),
            pl.BlockSpec((Cout, 9 * Cout), rep2),
            pl.BlockSpec((2, HW), rep2),
        ],
        out_specs=pl.BlockSpec((1, Cout, Nb * HW), lambda g: (g, 0, 0)),
        scratch_shapes=[
            pltpu.VMEM((Cin_p, pad_width), jnp.float32),     # pad1
            pltpu.VMEM((9 * Cin_p, Nb * HW), jnp.float32),   # slab1
            pltpu.VMEM((Cout, pad_width), jnp.float32),      # pad2
            pltpu.VMEM((9 * Cout, Nb * HW), jnp.float32),    # slab2
        ],
        compiler_params=pltpu.CompilerParams(
            dimension_semantics=("parallel",)),
    )(x, vec, w1_aug, w2, masks)

    # Unfold lanes -> images, drop batch padding, restore NCHW.
    out = out.reshape(n_groups, Cout, Nb, HW).transpose(0, 2, 1, 3)
    out = out.reshape(N_pad, Cout, H, W)[:N]
    return out


# ----------------------------------------------------------------------------
# Pure-JAX reference (for correctness check only)
# ----------------------------------------------------------------------------
def reference_forward(x_nchw, p, survival):
    dn = ("NHWC", "HWIO", "NHWC")
    x = jnp.transpose(x_nchw, (0, 2, 3, 1))

    def bnrelu(v, g, b, m, var):
        return jnp.maximum((v - m) / jnp.sqrt(var + EPS) * g + b, 0.0)

    a1 = bnrelu(x, p["bn1_gamma"], p["bn1_beta"], p["bn1_mean"], p["bn1_var"])
    sc = lax.conv_general_dilated(a1, p["wsc"][None, None], (1, 1), "VALID",
                                  dimension_numbers=dn) + p["bsc"]
    h = lax.conv_general_dilated(a1, p["w1_hwio"], (1, 1), ((1, 1), (1, 1)),
                                 dimension_numbers=dn) + p["b1"]
    a2 = bnrelu(h, p["bn2_gamma"], p["bn2_beta"], p["bn2_mean"], p["bn2_var"])
    c2 = lax.conv_general_dilated(a2, p["w2_hwio"], (1, 1), ((1, 1), (1, 1)),
                                  dimension_numbers=dn) + p["b2"]
    out = sc + survival * c2
    return jnp.transpose(out, (0, 3, 1, 2))


# ----------------------------------------------------------------------------
if __name__ == "__main__":
    key = jax.random.PRNGKey(0)
    ks = jax.random.split(key, 16)

    N, Cin, Cout, H, W = 2, 4, 8, 16, 16  # in_planes=4, planes=8, stride=1
    survival = 0.9

    x_nchw = jax.random.normal(ks[0], (N, Cin, H, W), jnp.float32)

    params = dict(
        bn1_gamma=jax.random.uniform(ks[1], (Cin,), jnp.float32, 0.5, 1.5),
        bn1_beta=0.1 * jax.random.normal(ks[2], (Cin,), jnp.float32),
        bn1_mean=0.1 * jax.random.normal(ks[3], (Cin,), jnp.float32),
        bn1_var=jax.random.uniform(ks[4], (Cin,), jnp.float32, 0.5, 1.5),
        bn2_gamma=jax.random.uniform(ks[5], (Cout,), jnp.float32, 0.5, 1.5),
        bn2_beta=0.1 * jax.random.normal(ks[6], (Cout,), jnp.float32),
        bn2_mean=0.1 * jax.random.normal(ks[7], (Cout,), jnp.float32),
        bn2_var=jax.random.uniform(ks[8], (Cout,), jnp.float32, 0.5, 1.5),
        w1_hwio=0.1 * jax.random.normal(ks[9], (3, 3, Cin, Cout), jnp.float32),
        b1=0.01 * jax.random.normal(ks[10], (Cout,), jnp.float32),
        w2_hwio=0.1 * jax.random.normal(ks[11], (3, 3, Cout, Cout), jnp.float32),
        b2=0.01 * jax.random.normal(ks[12], (Cout,), jnp.float32),
        wsc=0.1 * jax.random.normal(ks[13], (Cin, Cout), jnp.float32),
        bsc=0.01 * jax.random.normal(ks[14], (Cout,), jnp.float32),
    )

    out = jax.block_until_ready(basic_block_forward(x_nchw, params, survival))
    ref = jax.block_until_ready(reference_forward(x_nchw, params, survival))

    assert out.shape == (N, Cout, H, W), out.shape
    max_err = float(jnp.max(jnp.abs(out - ref)))
    assert jnp.allclose(out, ref, atol=5e-4, rtol=5e-4), max_err

    print("KERNEL_OK")
</pallas_src>

<mosaic_0001>
module attributes {stable_mosaic.version = 11 : i64} {
  func.func @basic_block_kernel(%arg0: i32, %arg1: memref<1x8x512xf32, #tpu.memory_space<vmem>>, %arg2: memref<8x4xf32, #tpu.memory_space<vmem>>, %arg3: memref<16x72xf32, #tpu.memory_space<vmem>>, %arg4: memref<8x72xf32, #tpu.memory_space<vmem>>, %arg5: memref<2x256xf32, #tpu.memory_space<vmem>>, %arg6: memref<1x8x512xf32, #tpu.memory_space<vmem>>, %arg7: memref<8x896xf32, #tpu.memory_space<vmem>>, %arg8: memref<72x512xf32, #tpu.memory_space<vmem>>, %arg9: memref<8x896xf32, #tpu.memory_space<vmem>>, %arg10: memref<72x512xf32, #tpu.memory_space<vmem>>) attributes {dimension_semantics = [#tpu.dimension_semantics<parallel>], iteration_bounds = array<i64: 1>, scalar_prefetch = 0 : i64, scratch_operands = 4 : i64, tpu.core_type = #tpu.core_type<tc>, window_params = [{transform_indices = @transform_0, window_bounds = array<i64: 1, 8, 512>}, {pipeline_mode = #tpu.pipeline_mode<synchronous>, transform_indices = @transform_1, window_bounds = array<i64: 8, 4>}, {pipeline_mode = #tpu.pipeline_mode<synchronous>, transform_indices = @transform_2, window_bounds = array<i64: 16, 72>}, {pipeline_mode = #tpu.pipeline_mode<synchronous>, transform_indices = @transform_3, window_bounds = array<i64: 8, 72>}, {pipeline_mode = #tpu.pipeline_mode<synchronous>, transform_indices = @transform_4, window_bounds = array<i64: 2, 256>}, {transform_indices = @transform_5, window_bounds = array<i64: 1, 8, 512>}]} {
    %c0 = arith.constant 0 : index
    %c0_0 = arith.constant 0 : index
    %0 = vector.load %arg5[%c0, %c0_0] : memref<2x256xf32, #tpu.memory_space<vmem>>, vector<1x256xf32>
    %c1 = arith.constant 1 : index
    %c0_1 = arith.constant 0 : index
    %1 = vector.load %arg5[%c1, %c0_1] : memref<2x256xf32, #tpu.memory_space<vmem>>, vector<1x256xf32>
    %c0_2 = arith.constant 0 : index
    %c0_3 = arith.constant 0 : index
    %2 = vector.load %arg2[%c0_2, %c0_3] : memref<8x4xf32, #tpu.memory_space<vmem>>, vector<8x1xf32>
    %c0_4 = arith.constant 0 : index
    %c1_5 = arith.constant 1 : index
    %3 = vector.load %arg2[%c0_4, %c1_5] : memref<8x4xf32, #tpu.memory_space<vmem>>, vector<8x1xf32>
    %c0_6 = arith.constant 0 : index
    %c2 = arith.constant 2 : index
    %4 = vector.load %arg2[%c0_6, %c2] : memref<8x4xf32, #tpu.memory_space<vmem>>, vector<8x1xf32>
    %c0_7 = arith.constant 0 : index
    %c3 = arith.constant 3 : index
    %5 = vector.load %arg2[%c0_7, %c3] : memref<8x4xf32, #tpu.memory_space<vmem>>, vector<8x1xf32>
    %c0_8 = arith.constant 0 : index
    %c0_9 = arith.constant 0 : index
    %c0_10 = arith.constant 0 : index
    %6 = vector.load %arg1[%c0_8, %c0_9, %c0_10] : memref<1x8x512xf32, #tpu.memory_space<vmem>>, vector<1x8x512xf32>
    %7 = vector.shape_cast %6 : vector<1x8x512xf32> to vector<8x512xf32>
    %8 = vector.broadcast %2 : vector<8x1xf32> to vector<8x512xf32>
    %9 = arith.mulf %7, %8 : vector<8x512xf32>
    %10 = vector.broadcast %3 : vector<8x1xf32> to vector<8x512xf32>
    %11 = arith.addf %9, %10 : vector<8x512xf32>
    %cst = arith.constant 0.000000e+00 : f32
    %12 = vector.broadcast %cst : f32 to vector<8x512xf32>
    %13 = arith.maximumf %11, %12 : vector<8x512xf32>
    %c0_11 = arith.constant 0 : index
    %c0_12 = arith.constant 0 : index
    %14 = vector.load %arg3[%c0_11, %c0_12] : memref<16x72xf32, #tpu.memory_space<vmem>>, vector<16x72xf32>
    %cst_13 = arith.constant 0.000000e+00 : f32
    %15 = vector.broadcast %cst_13 : f32 to vector<8x128xf32>
    %c0_14 = arith.constant 0 : index
    %c0_15 = arith.constant 0 : index
    %16 = vector.load %arg7[%c0_14, %c0_15] : memref<8x896xf32, #tpu.memory_space<vmem>>, vector<8x128xf32>
    tpu.vector_store %arg7[%c0_14, %c0_15], %15 {strides = array<i32>} : memref<8x896xf32, #tpu.memory_space<vmem>>, vector<8x128xf32>,
    %17 = vector.extract_strided_slice %13 {offsets = [0, 0], sizes = [8, 256], strides = [1, 1]} : vector<8x512xf32> to vector<8x256xf32>
    %c0_16 = arith.constant 0 : index
    %c128 = arith.constant 128 : index
    %18 = vector.load %arg7[%c0_16, %c128] : memref<8x896xf32, #tpu.memory_space<vmem>>, vector<8x256xf32>
    tpu.vector_store %arg7[%c0_16, %c128], %17 {strides = array<i32>} : memref<8x896xf32, #tpu.memory_space<vmem>>, vector<8x256xf32>,
    %c0_17 = arith.constant 0 : index
    %c384 = arith.constant 384 : index
    %19 = vector.load %arg7[%c0_17, %c384] : memref<8x896xf32, #tpu.memory_space<vmem>>, vector<8x128xf32>
    tpu.vector_store %arg7[%c0_17, %c384], %15 {strides = array<i32>} : memref<8x896xf32, #tpu.memory_space<vmem>>, vector<8x128xf32>,
    %20 = vector.extract_strided_slice %13 {offsets = [0, 256], sizes = [8, 256], strides = [1, 1]} : vector<8x512xf32> to vector<8x256xf32>
    %c0_18 = arith.constant 0 : index
    %c512 = arith.constant 512 : index
    %21 = vector.load %arg7[%c0_18, %c512] : memref<8x896xf32, #tpu.memory_space<vmem>>, vector<8x256xf32>
    tpu.vector_store %arg7[%c0_18, %c512], %20 {strides = array<i32>} : memref<8x896xf32, #tpu.memory_space<vmem>>, vector<8x256xf32>,
    %c0_19 = arith.constant 0 : index
    %c768 = arith.constant 768 : index
    %22 = vector.load %arg7[%c0_19, %c768] : memref<8x896xf32, #tpu.memory_space<vmem>>, vector<8x128xf32>
    tpu.vector_store %arg7[%c0_19, %c768], %15 {strides = array<i32>} : memref<8x896xf32, #tpu.memory_space<vmem>>, vector<8x128xf32>,
    %c32 = arith.constant 32 : index
    %c0_20 = arith.constant 0 : index
    %23 = vector.load %arg8[%c32, %c0_20] : memref<72x512xf32, #tpu.memory_space<vmem>>, vector<8x512xf32>
    tpu.vector_store %arg8[%c32, %c0_20], %13 {strides = array<i32>} : memref<72x512xf32, #tpu.memory_space<vmem>>, vector<8x512xf32>,
    %c0_21 = arith.constant 0 : index
    %c111 = arith.constant 111 : index
    %24 = vector.load %arg7[%c0_21, %c111] : memref<8x896xf32, #tpu.memory_space<vmem>>, vector<8x256xf32>
    %25 = vector.broadcast %0 : vector<1x256xf32> to vector<8x256xf32>
    %26 = arith.mulf %24, %25 : vector<8x256xf32>
    %c0_22 = arith.constant 0 : index
    %c0_23 = arith.constant 0 : index
    %27 = vector.load %arg8[%c0_22, %c0_23] : memref<72x512xf32, #tpu.memory_space<vmem>>, vector<8x256xf32>
    tpu.vector_store %arg8[%c0_22, %c0_23], %26 {strides = array<i32>} : memref<72x512xf32, #tpu.memory_space<vmem>>, vector<8x256xf32>,
    %c0_24 = arith.constant 0 : index
    %c495 = arith.constant 495 : index
    %28 = vector.load %arg7[%c0_24, %c495] : memref<8x896xf32, #tpu.memory_space<vmem>>, vector<8x256xf32>
    %29 = vector.broadcast %0 : vector<1x256xf32> to vector<8x256xf32>
    %30 = arith.mulf %28, %29 : vector<8x256xf32>
    %c0_25 = arith.constant 0 : index
    %c256 = arith.constant 256 : index
    %31 = vector.load %arg8[%c0_25, %c256] : memref<72x512xf32, #tpu.memory_space<vmem>>, vector<8x256xf32>
    tpu.vector_store %arg8[%c0_25, %c256], %30 {strides = array<i32>} : memref<72x512xf32, #tpu.memory_space<vmem>>, vector<8x256xf32>,
    %c0_26 = arith.constant 0 : index
    %c112 = arith.constant 112 : index
    %32 = vector.load %arg7[%c0_26, %c112] : memref<8x896xf32, #tpu.memory_space<vmem>>, vector<8x256xf32>
    %c8 = arith.constant 8 : index
    %c0_27 = arith.constant 0 : index
    %33 = vector.load %arg8[%c8, %c0_27] : memref<72x512xf32, #tpu.memory_space<vmem>>, vector<8x256xf32>
    tpu.vector_store %arg8[%c8, %c0_27], %32 {strides = array<i32>} : memref<72x512xf32, #tpu.memory_space<vmem>>, vector<8x256xf32>,
    %c0_28 = arith.constant 0 : index
    %c496 = arith.constant 496 : index
    %34 = vector.load %arg7[%c0_28, %c496] : memref<8x896xf32, #tpu.memory_space<vmem>>, vector<8x256xf32>
    %c8_29 = arith.constant 8 : index
    %c256_30 = arith.constant 256 : index
    %35 = vector.load %arg8[%c8_29, %c256_30] : memref<72x512xf32, #tpu.memory_space<vmem>>, vector<8x256xf32>
    tpu.vector_store %arg8[%c8_29, %c256_30], %34 {strides = array<i32>} : memref<72x512xf32, #tpu.memory_space<vmem>>, vector<8x256xf32>,
    %c0_31 = arith.constant 0 : index
    %c113 = arith.constant 113 : index
    %36 = vector.load %arg7[%c0_31, %c113] : memref<8x896xf32, #tpu.memory_space<vmem>>, vector<8x256xf32>
    %37 = vector.broadcast %1 : vector<1x256xf32> to vector<8x256xf32>
    %38 = arith.mulf %36, %37 : vector<8x256xf32>
    %c16 = arith.constant 16 : index
    %c0_32 = arith.constant 0 : index
    %39 = vector.load %arg8[%c16, %c0_32] : memref<72x512xf32, #tpu.memory_space<vmem>>, vector<8x256xf32>
    tpu.vector_store %arg8[%c16, %c0_32], %38 {strides = array<i32>} : memref<72x512xf32, #tpu.memory_space<vmem>>, vector<8x256xf32>,
    %c0_33 = arith.constant 0 : index
    %c497 = arith.constant 497 : index
    %40 = vector.load %arg7[%c0_33, %c497] : memref<8x896xf32, #tpu.memory_space<vmem>>, vector<8x256xf32>
    %41 = vector.broadcast %1 : vector<1x256xf32> to vector<8x256xf32>
    %42 = arith.mulf %40, %41 : vector<8x256xf32>
    %c16_34 = arith.constant 16 : index
    %c256_35 = arith.constant 256 : index
    %43 = vector.load %arg8[%c16_34, %c256_35] : memref<72x512xf32, #tpu.memory_space<vmem>>, vector<8x256xf32>
    tpu.vector_store %arg8[%c16_34, %c256_35], %42 {strides = array<i32>} : memref<72x512xf32, #tpu.memory_space<vmem>>, vector<8x256xf32>,
    %c0_36 = arith.constant 0 : index
    %c127 = arith.constant 127 : index
    %44 = vector.load %arg7[%c0_36, %c127] : memref<8x896xf32, #tpu.memory_space<vmem>>, vector<8x256xf32>
    %45 = vector.broadcast %0 : vector<1x256xf32> to vector<8x256xf32>
    %46 = arith.mulf %44, %45 : vector<8x256xf32>
    %c24 = arith.constant 24 : index
    %c0_37 = arith.constant 0 : index
    %47 = vector.load %arg8[%c24, %c0_37] : memref<72x512xf32, #tpu.memory_space<vmem>>, vector<8x256xf32>
    tpu.vector_store %arg8[%c24, %c0_37], %46 {strides = array<i32>} : memref<72x512xf32, #tpu.memory_space<vmem>>, vector<8x256xf32>,
    %c0_38 = arith.constant 0 : index
    %c511 = arith.constant 511 : index
    %48 = vector.load %arg7[%c0_38, %c511] : memref<8x896xf32, #tpu.memory_space<vmem>>, vector<8x256xf32>
    %49 = vector.broadcast %0 : vector<1x256xf32> to vector<8x256xf32>
    %50 = arith.mulf %48, %49 : vector<8x256xf32>
    %c24_39 = arith.constant 24 : index
    %c256_40 = arith.constant 256 : index
    %51 = vector.load %arg8[%c24_39, %c256_40] : memref<72x512xf32, #tpu.memory_space<vmem>>, vector<8x256xf32>
    tpu.vector_store %arg8[%c24_39, %c256_40], %50 {strides = array<i32>} : memref<72x512xf32, #tpu.memory_space<vmem>>, vector<8x256xf32>,
    %c0_41 = arith.constant 0 : index
    %c129 = arith.constant 129 : index
    %52 = vector.load %arg7[%c0_41, %c129] : memref<8x896xf32, #tpu.memory_space<vmem>>, vector<8x256xf32>
    %53 = vector.broadcast %1 : vector<1x256xf32> to vector<8x256xf32>
    %54 = arith.mulf %52, %53 : vector<8x256xf32>
    %c40 = arith.constant 40 : index
    %c0_42 = arith.constant 0 : index
    %55 = vector.load %arg8[%c40, %c0_42] : memref<72x512xf32, #tpu.memory_space<vmem>>, vector<8x256xf32>
    tpu.vector_store %arg8[%c40, %c0_42], %54 {strides = array<i32>} : memref<72x512xf32, #tpu.memory_space<vmem>>, vector<8x256xf32>,
    %c0_43 = arith.constant 0 : index
    %c513 = arith.constant 513 : index
    %56 = vector.load %arg7[%c0_43, %c513] : memref<8x896xf32, #tpu.memory_space<vmem>>, vector<8x256xf32>
    %57 = vector.broadcast %1 : vector<1x256xf32> to vector<8x256xf32>
    %58 = arith.mulf %56, %57 : vector<8x256xf32>
    %c40_44 = arith.constant 40 : index
    %c256_45 = arith.constant 256 : index
    %59 = vector.load %arg8[%c40_44, %c256_45] : memref<72x512xf32, #tpu.memory_space<vmem>>, vector<8x256xf32>
    tpu.vector_store %arg8[%c40_44, %c256_45], %58 {strides = array<i32>} : memref<72x512xf32, #tpu.memory_space<vmem>>, vector<8x256xf32>,
    %c0_46 = arith.constant 0 : index
    %c143 = arith.constant 143 : index
    %60 = vector.load %arg7[%c0_46, %c143] : memref<8x896xf32, #tpu.memory_space<vmem>>, vector<8x256xf32>
    %61 = vector.broadcast %0 : vector<1x256xf32> to vector<8x256xf32>
    %62 = arith.mulf %60, %61 : vector<8x256xf32>
    %c48 = arith.constant 48 : index
    %c0_47 = arith.constant 0 : index
    %63 = vector.load %arg8[%c48, %c0_47] : memref<72x512xf32, #tpu.memory_space<vmem>>, vector<8x256xf32>
    tpu.vector_store %arg8[%c48, %c0_47], %62 {strides = array<i32>} : memref<72x512xf32, #tpu.memory_space<vmem>>, vector<8x256xf32>,
    %c0_48 = arith.constant 0 : index
    %c527 = arith.constant 527 : index
    %64 = vector.load %arg7[%c0_48, %c527] : memref<8x896xf32, #tpu.memory_space<vmem>>, vector<8x256xf32>
    %65 = vector.broadcast %0 : vector<1x256xf32> to vector<8x256xf32>
    %66 = arith.mulf %64, %65 : vector<8x256xf32>
    %c48_49 = arith.constant 48 : index
    %c256_50 = arith.constant 256 : index
    %67 = vector.load %arg8[%c48_49, %c256_50] : memref<72x512xf32, #tpu.memory_space<vmem>>, vector<8x256xf32>
    tpu.vector_store %arg8[%c48_49, %c256_50], %66 {strides = array<i32>} : memref<72x512xf32, #tpu.memory_space<vmem>>, vector<8x256xf32>,
    %c0_51 = arith.constant 0 : index
    %c144 = arith.constant 144 : index
    %68 = vector.load %arg7[%c0_51, %c144] : memref<8x896xf32, #tpu.memory_space<vmem>>, vector<8x256xf32>
    %c56 = arith.constant 56 : index
    %c0_52 = arith.constant 0 : index
    %69 = vector.load %arg8[%c56, %c0_52] : memref<72x512xf32, #tpu.memory_space<vmem>>, vector<8x256xf32>
    tpu.vector_store %arg8[%c56, %c0_52], %68 {strides = array<i32>} : memref<72x512xf32, #tpu.memory_space<vmem>>, vector<8x256xf32>,
    %c0_53 = arith.constant 0 : index
    %c528 = arith.constant 528 : index
    %70 = vector.load %arg7[%c0_53, %c528] : memref<8x896xf32, #tpu.memory_space<vmem>>, vector<8x256xf32>
    %c56_54 = arith.constant 56 : index
    %c256_55 = arith.constant 256 : index
    %71 = vector.load %arg8[%c56_54, %c256_55] : memref<72x512xf32, #tpu.memory_space<vmem>>, vector<8x256xf32>
    tpu.vector_store %arg8[%c56_54, %c256_55], %70 {strides = array<i32>} : memref<72x512xf32, #tpu.memory_space<vmem>>, vector<8x256xf32>,
    %c0_56 = arith.constant 0 : index
    %c145 = arith.constant 145 : index
    %72 = vector.load %arg7[%c0_56, %c145] : memref<8x896xf32, #tpu.memory_space<vmem>>, vector<8x256xf32>
    %73 = vector.broadcast %1 : vector<1x256xf32> to vector<8x256xf32>
    %74 = arith.mulf %72, %73 : vector<8x256xf32>
    %c64 = arith.constant 64 : index
    %c0_57 = arith.constant 0 : index
    %75 = vector.load %arg8[%c64, %c0_57] : memref<72x512xf32, #tpu.memory_space<vmem>>, vector<8x256xf32>
    tpu.vector_store %arg8[%c64, %c0_57], %74 {strides = array<i32>} : memref<72x512xf32, #tpu.memory_space<vmem>>, vector<8x256xf32>,
    %c0_58 = arith.constant 0 : index
    %c529 = arith.constant 529 : index
    %76 = vector.load %arg7[%c0_58, %c529] : memref<8x896xf32, #tpu.memory_space<vmem>>, vector<8x256xf32>
    %77 = vector.broadcast %1 : vector<1x256xf32> to vector<8x256xf32>
    %78 = arith.mulf %76, %77 : vector<8x256xf32>
    %c64_59 = arith.constant 64 : index
    %c256_60 = arith.constant 256 : index
    %79 = vector.load %arg8[%c64_59, %c256_60] : memref<72x512xf32, #tpu.memory_space<vmem>>, vector<8x256xf32>
    tpu.vector_store %arg8[%c64_59, %c256_60], %78 {strides = array<i32>} : memref<72x512xf32, #tpu.memory_space<vmem>>, vector<8x256xf32>,
    %c0_61 = arith.constant 0 : index
    %c0_62 = arith.constant 0 : index
    %80 = vector.load %arg8[%c0_61, %c0_62] : memref<72x512xf32, #tpu.memory_space<vmem>>, vector<72x512xf32>
    %cst_63 = arith.constant dense<0.000000e+00> : vector<16x512xf32>
    %81 = tpu.matmul %14, %80, %cst_63 {dimension_numbers = #tpu.dot_dimension_numbers<[1], [0], [0], [1], [0, 0, 1, 1], [], []>} : vector<16x72xf32>, vector<72x512xf32>, vector<16x512xf32> -> vector<16x512xf32>
    %82 = vector.extract_strided_slice %81 {offsets = [0, 0], sizes = [8, 512], strides = [1, 1]} : vector<16x512xf32> to vector<8x512xf32>
    %83 = vector.extract_strided_slice %81 {offsets = [8, 0], sizes = [8, 512], strides = [1, 1]} : vector<16x512xf32> to vector<8x512xf32>
    %84 = vector.broadcast %4 : vector<8x1xf32> to vector<8x512xf32>
    %85 = arith.addf %82, %84 : vector<8x512xf32>
    %cst_64 = arith.constant 0.000000e+00 : f32
    %86 = vector.broadcast %cst_64 : f32 to vector<8x512xf32>
    %87 = arith.maximumf %85, %86 : vector<8x512xf32>
    %c0_65 = arith.constant 0 : index
    %c0_66 = arith.constant 0 : index
    %88 = vector.load %arg4[%c0_65, %c0_66] : memref<8x72xf32, #tpu.memory_space<vmem>>, vector<8x72xf32>
    %cst_67 = arith.constant 0.000000e+00 : f32
    %89 = vector.broadcast %cst_67 : f32 to vector<8x128xf32>
    %c0_68 = arith.constant 0 : index
    %c0_69 = arith.constant 0 : index
    %90 = vector.load %arg9[%c0_68, %c0_69] : memref<8x896xf32, #tpu.memory_space<vmem>>, vector<8x128xf32>
    tpu.vector_store %arg9[%c0_68, %c0_69], %89 {strides = array<i32>} : memref<8x896xf32, #tpu.memory_space<vmem>>, vector<8x128xf32>,
    %91 = vector.extract_strided_slice %87 {offsets = [0, 0], sizes = [8, 256], strides = [1, 1]} : vector<8x512xf32> to vector<8x256xf32>
    %c0_70 = arith.constant 0 : index
    %c128_71 = arith.constant 128 : index
    %92 = vector.load %arg9[%c0_70, %c128_71] : memref<8x896xf32, #tpu.memory_space<vmem>>, vector<8x256xf32>
    tpu.vector_store %arg9[%c0_70, %c128_71], %91 {strides = array<i32>} : memref<8x896xf32, #tpu.memory_space<vmem>>, vector<8x256xf32>,
    %c0_72 = arith.constant 0 : index
    %c384_73 = arith.constant 384 : index
    %93 = vector.load %arg9[%c0_72, %c384_73] : memref<8x896xf32, #tpu.memory_space<vmem>>, vector<8x128xf32>
    tpu.vector_store %arg9[%c0_72, %c384_73], %89 {strides = array<i32>} : memref<8x896xf32, #tpu.memory_space<vmem>>, vector<8x128xf32>,
    %94 = vector.extract_strided_slice %87 {offsets = [0, 256], sizes = [8, 256], strides = [1, 1]} : vector<8x512xf32> to vector<8x256xf32>
    %c0_74 = arith.constant 0 : index
    %c512_75 = arith.constant 512 : index
    %95 = vector.load %arg9[%c0_74, %c512_75] : memref<8x896xf32, #tpu.memory_space<vmem>>, vector<8x256xf32>
    tpu.vector_store %arg9[%c0_74, %c512_75], %94 {strides = array<i32>} : memref<8x896xf32, #tpu.memory_space<vmem>>, vector<8x256xf32>,
    %c0_76 = arith.constant 0 : index
    %c768_77 = arith.constant 768 : index
    %96 = vector.load %arg9[%c0_76, %c768_77] : memref<8x896xf32, #tpu.memory_space<vmem>>, vector<8x128xf32>
    tpu.vector_store %arg9[%c0_76, %c768_77], %89 {strides = array<i32>} : memref<8x896xf32, #tpu.memory_space<vmem>>, vector<8x128xf32>,
    %c32_78 = arith.constant 32 : index
    %c0_79 = arith.constant 0 : index
    %97 = vector.load %arg10[%c32_78, %c0_79] : memref<72x512xf32, #tpu.memory_space<vmem>>, vector<8x512xf32>
    tpu.vector_store %arg10[%c32_78, %c0_79], %87 {strides = array<i32>} : memref<72x512xf32, #tpu.memory_space<vmem>>, vector<8x512xf32>,
    %c0_80 = arith.constant 0 : index
    %c111_81 = arith.constant 111 : index
    %98 = vector.load %arg9[%c0_80, %c111_81] : memref<8x896xf32, #tpu.memory_space<vmem>>, vector<8x256xf32>
    %99 = vector.broadcast %0 : vector<1x256xf32> to vector<8x256xf32>
    %100 = arith.mulf %98, %99 : vector<8x256xf32>
    %c0_82 = arith.constant 0 : index
    %c0_83 = arith.constant 0 : index
    %101 = vector.load %arg10[%c0_82, %c0_83] : memref<72x512xf32, #tpu.memory_space<vmem>>, vector<8x256xf32>
    tpu.vector_store %arg10[%c0_82, %c0_83], %100 {strides = array<i32>} : memref<72x512xf32, #tpu.memory_space<vmem>>, vector<8x256xf32>,
    %c0_84 = arith.constant 0 : index
    %c495_85 = arith.constant 495 : index
    %102 = vector.load %arg9[%c0_84, %c495_85] : memref<8x896xf32, #tpu.memory_space<vmem>>, vector<8x256xf32>
    %103 = vector.broadcast %0 : vector<1x256xf32> to vector<8x256xf32>
    %104 = arith.mulf %102, %103 : vector<8x256xf32>
    %c0_86 = arith.constant 0 : index
    %c256_87 = arith.constant 256 : index
    %105 = vector.load %arg10[%c0_86, %c256_87] : memref<72x512xf32, #tpu.memory_space<vmem>>, vector<8x256xf32>
    tpu.vector_store %arg10[%c0_86, %c256_87], %104 {strides = array<i32>} : memref<72x512xf32, #tpu.memory_space<vmem>>, vector<8x256xf32>,
    %c0_88 = arith.constant 0 : index
    %c112_89 = arith.constant 112 : index
    %106 = vector.load %arg9[%c0_88, %c112_89] : memref<8x896xf32, #tpu.memory_space<vmem>>, vector<8x256xf32>
    %c8_90 = arith.constant 8 : index
    %c0_91 = arith.constant 0 : index
    %107 = vector.load %arg10[%c8_90, %c0_91] : memref<72x512xf32, #tpu.memory_space<vmem>>, vector<8x256xf32>
    tpu.vector_store %arg10[%c8_90, %c0_91], %106 {strides = array<i32>} : memref<72x512xf32, #tpu.memory_space<vmem>>, vector<8x256xf32>,
    %c0_92 = arith.constant 0 : index
    %c496_93 = arith.constant 496 : index
    %108 = vector.load %arg9[%c0_92, %c496_93] : memref<8x896xf32, #tpu.memory_space<vmem>>, vector<8x256xf32>
    %c8_94 = arith.constant 8 : index
    %c256_95 = arith.constant 256 : index
    %109 = vector.load %arg10[%c8_94, %c256_95] : memref<72x512xf32, #tpu.memory_space<vmem>>, vector<8x256xf32>
    tpu.vector_store %arg10[%c8_94, %c256_95], %108 {strides = array<i32>} : memref<72x512xf32, #tpu.memory_space<vmem>>, vector<8x256xf32>,
    %c0_96 = arith.constant 0 : index
    %c113_97 = arith.constant 113 : index
    %110 = vector.load %arg9[%c0_96, %c113_97] : memref<8x896xf32, #tpu.memory_space<vmem>>, vector<8x256xf32>
    %111 = vector.broadcast %1 : vector<1x256xf32> to vector<8x256xf32>
    %112 = arith.mulf %110, %111 : vector<8x256xf32>
    %c16_98 = arith.constant 16 : index
    %c0_99 = arith.constant 0 : index
    %113 = vector.load %arg10[%c16_98, %c0_99] : memref<72x512xf32, #tpu.memory_space<vmem>>, vector<8x256xf32>
    tpu.vector_store %arg10[%c16_98, %c0_99], %112 {strides = array<i32>} : memref<72x512xf32, #tpu.memory_space<vmem>>, vector<8x256xf32>,
    %c0_100 = arith.constant 0 : index
    %c497_101 = arith.constant 497 : index
    %114 = vector.load %arg9[%c0_100, %c497_101] : memref<8x896xf32, #tpu.memory_space<vmem>>, vector<8x256xf32>
    %115 = vector.broadcast %1 : vector<1x256xf32> to vector<8x256xf32>
    %116 = arith.mulf %114, %115 : vector<8x256xf32>
    %c16_102 = arith.constant 16 : index
    %c256_103 = arith.constant 256 : index
    %117 = vector.load %arg10[%c16_102, %c256_103] : memref<72x512xf32, #tpu.memory_space<vmem>>, vector<8x256xf32>
    tpu.vector_store %arg10[%c16_102, %c256_103], %116 {strides = array<i32>} : memref<72x512xf32, #tpu.memory_space<vmem>>, vector<8x256xf32>,
    %c0_104 = arith.constant 0 : index
    %c127_105 = arith.constant 127 : index
    %118 = vector.load %arg9[%c0_104, %c127_105] : memref<8x896xf32, #tpu.memory_space<vmem>>, vector<8x256xf32>
    %119 = vector.broadcast %0 : vector<1x256xf32> to vector<8x256xf32>
    %120 = arith.mulf %118, %119 : vector<8x256xf32>
    %c24_106 = arith.constant 24 : index
    %c0_107 = arith.constant 0 : index
    %121 = vector.load %arg10[%c24_106, %c0_107] : memref<72x512xf32, #tpu.memory_space<vmem>>, vector<8x256xf32>
    tpu.vector_store %arg10[%c24_106, %c0_107], %120 {strides = array<i32>} : memref<72x512xf32, #tpu.memory_space<vmem>>, vector<8x256xf32>,
    %c0_108 = arith.constant 0 : index
    %c511_109 = arith.constant 511 : index
    %122 = vector.load %arg9[%c0_108, %c511_109] : memref<8x896xf32, #tpu.memory_space<vmem>>, vector<8x256xf32>
    %123 = vector.broadcast %0 : vector<1x256xf32> to vector<8x256xf32>
    %124 = arith.mulf %122, %123 : vector<8x256xf32>
    %c24_110 = arith.constant 24 : index
    %c256_111 = arith.constant 256 : index
    %125 = vector.load %arg10[%c24_110, %c256_111] : memref<72x512xf32, #tpu.memory_space<vmem>>, vector<8x256xf32>
    tpu.vector_store %arg10[%c24_110, %c256_111], %124 {strides = array<i32>} : memref<72x512xf32, #tpu.memory_space<vmem>>, vector<8x256xf32>,
    %c0_112 = arith.constant 0 : index
    %c129_113 = arith.constant 129 : index
    %126 = vector.load %arg9[%c0_112, %c129_113] : memref<8x896xf32, #tpu.memory_space<vmem>>, vector<8x256xf32>
    %127 = vector.broadcast %1 : vector<1x256xf32> to vector<8x256xf32>
    %128 = arith.mulf %126, %127 : vector<8x256xf32>
    %c40_114 = arith.constant 40 : index
    %c0_115 = arith.constant 0 : index
    %129 = vector.load %arg10[%c40_114, %c0_115] : memref<72x512xf32, #tpu.memory_space<vmem>>, vector<8x256xf32>
    tpu.vector_store %arg10[%c40_114, %c0_115], %128 {strides = array<i32>} : memref<72x512xf32, #tpu.memory_space<vmem>>, vector<8x256xf32>,
    %c0_116 = arith.constant 0 : index
    %c513_117 = arith.constant 513 : index
    %130 = vector.load %arg9[%c0_116, %c513_117] : memref<8x896xf32, #tpu.memory_space<vmem>>, vector<8x256xf32>
    %131 = vector.broadcast %1 : vector<1x256xf32> to vector<8x256xf32>
    %132 = arith.mulf %130, %131 : vector<8x256xf32>
    %c40_118 = arith.constant 40 : index
    %c256_119 = arith.constant 256 : index
    %133 = vector.load %arg10[%c40_118, %c256_119] : memref<72x512xf32, #tpu.memory_space<vmem>>, vector<8x256xf32>
    tpu.vector_store %arg10[%c40_118, %c256_119], %132 {strides = array<i32>} : memref<72x512xf32, #tpu.memory_space<vmem>>, vector<8x256xf32>,
    %c0_120 = arith.constant 0 : index
    %c143_121 = arith.constant 143 : index
    %134 = vector.load %arg9[%c0_120, %c143_121] : memref<8x896xf32, #tpu.memory_space<vmem>>, vector<8x256xf32>
    %135 = vector.broadcast %0 : vector<1x256xf32> to vector<8x256xf32>
    %136 = arith.mulf %134, %135 : vector<8x256xf32>
    %c48_122 = arith.constant 48 : index
    %c0_123 = arith.constant 0 : index
    %137 = vector.load %arg10[%c48_122, %c0_123] : memref<72x512xf32, #tpu.memory_space<vmem>>, vector<8x256xf32>
    tpu.vector_store %arg10[%c48_122, %c0_123], %136 {strides = array<i32>} : memref<72x512xf32, #tpu.memory_space<vmem>>, vector<8x256xf32>,
    %c0_124 = arith.constant 0 : index
    %c527_125 = arith.constant 527 : index
    %138 = vector.load %arg9[%c0_124, %c527_125] : memref<8x896xf32, #tpu.memory_space<vmem>>, vector<8x256xf32>
    %139 = vector.broadcast %0 : vector<1x256xf32> to vector<8x256xf32>
    %140 = arith.mulf %138, %139 : vector<8x256xf32>
    %c48_126 = arith.constant 48 : index
    %c256_127 = arith.constant 256 : index
    %141 = vector.load %arg10[%c48_126, %c256_127] : memref<72x512xf32, #tpu.memory_space<vmem>>, vector<8x256xf32>
    tpu.vector_store %arg10[%c48_126, %c256_127], %140 {strides = array<i32>} : memref<72x512xf32, #tpu.memory_space<vmem>>, vector<8x256xf32>,
    %c0_128 = arith.constant 0 : index
    %c144_129 = arith.constant 144 : index
    %142 = vector.load %arg9[%c0_128, %c144_129] : memref<8x896xf32, #tpu.memory_space<vmem>>, vector<8x256xf32>
    %c56_130 = arith.constant 56 : index
    %c0_131 = arith.constant 0 : index
    %143 = vector.load %arg10[%c56_130, %c0_131] : memref<72x512xf32, #tpu.memory_space<vmem>>, vector<8x256xf32>
    tpu.vector_store %arg10[%c56_130, %c0_131], %142 {strides = array<i32>} : memref<72x512xf32, #tpu.memory_space<vmem>>, vector<8x256xf32>,
    %c0_132 = arith.constant 0 : index
    %c528_133 = arith.constant 528 : index
    %144 = vector.load %arg9[%c0_132, %c528_133] : memref<8x896xf32, #tpu.memory_space<vmem>>, vector<8x256xf32>
    %c56_134 = arith.constant 56 : index
    %c256_135 = arith.constant 256 : index
    %145 = vector.load %arg10[%c56_134, %c256_135] : memref<72x512xf32, #tpu.memory_space<vmem>>, vector<8x256xf32>
    tpu.vector_store %arg10[%c56_134, %c256_135], %144 {strides = array<i32>} : memref<72x512xf32, #tpu.memory_space<vmem>>, vector<8x256xf32>,
    %c0_136 = arith.constant 0 : index
    %c145_137 = arith.constant 145 : index
    %146 = vector.load %arg9[%c0_136, %c145_137] : memref<8x896xf32, #tpu.memory_space<vmem>>, vector<8x256xf32>
    %147 = vector.broadcast %1 : vector<1x256xf32> to vector<8x256xf32>
    %148 = arith.mulf %146, %147 : vector<8x256xf32>
    %c64_138 = arith.constant 64 : index
    %c0_139 = arith.constant 0 : index
    %149 = vector.load %arg10[%c64_138, %c0_139] : memref<72x512xf32, #tpu.memory_space<vmem>>, vector<8x256xf32>
    tpu.vector_store %arg10[%c64_138, %c0_139], %148 {strides = array<i32>} : memref<72x512xf32, #tpu.memory_space<vmem>>, vector<8x256xf32>,
    %c0_140 = arith.constant 0 : index
    %c529_141 = arith.constant 529 : index
    %150 = vector.load %arg9[%c0_140, %c529_141] : memref<8x896xf32, #tpu.memory_space<vmem>>, vector<8x256xf32>
    %151 = vector.broadcast %1 : vector<1x256xf32> to vector<8x256xf32>
    %152 = arith.mulf %150, %151 : vector<8x256xf32>
    %c64_142 = arith.constant 64 : index
    %c256_143 = arith.constant 256 : index
    %153 = vector.load %arg10[%c64_142, %c256_143] : memref<72x512xf32, #tpu.memory_space<vmem>>, vector<8x256xf32>
    tpu.vector_store %arg10[%c64_142, %c256_143], %152 {strides = array<i32>} : memref<72x512xf32, #tpu.memory_space<vmem>>, vector<8x256xf32>,
    %c0_144 = arith.constant 0 : index
    %c0_145 = arith.constant 0 : index
    %154 = vector.load %arg10[%c0_144, %c0_145] : memref<72x512xf32, #tpu.memory_space<vmem>>, vector<72x512xf32>
    %cst_146 = arith.constant dense<0.000000e+00> : vector<8x512xf32>
    %155 = tpu.matmul %88, %154, %cst_146 {dimension_numbers = #tpu.dot_dimension_numbers<[1], [0], [0], [1], [0, 0, 1, 1], [], []>} : vector<8x72xf32>, vector<72x512xf32>, vector<8x512xf32> -> vector<8x512xf32>
    %156 = arith.addf %83, %155 : vector<8x512xf32>
    %157 = vector.broadcast %5 : vector<8x1xf32> to vector<8x512xf32>
    %158 = arith.addf %156, %157 : vector<8x512xf32>
    %c0_147 = arith.constant 0 : index
    %c0_148 = arith.constant 0 : index
    %c0_149 = arith.constant 0 : index
    %159 = vector.load %arg6[%c0_147, %c0_148, %c0_149] : memref<1x8x512xf32, #tpu.memory_space<vmem>>, vector<1x8x512xf32>
    %160 = vector.shape_cast %159 : vector<1x8x512xf32> to vector<8x512xf32>
    %161 = vector.shape_cast %158 : vector<8x512xf32> to vector<1x8x512xf32>
    tpu.vector_store %arg6[%c0_147, %c0_148, %c0_149], %161 {strides = array<i32>} : memref<1x8x512xf32, #tpu.memory_space<vmem>>, vector<1x8x512xf32>,
    return
  }
  func.func @transform_0(%arg0: i32) -> (i32, i32, i32) {
    %c0_i32 = arith.constant 0 : i32
    %c0_i32_0 = arith.constant 0 : i32
    %c0_i32_1 = arith.constant 0 : i32
    return %arg0, %c0_i32, %c0_i32_0 : i32, i32, i32
  }
  func.func @transform_1(%arg0: i32) -> (i32, i32) {
    %c0_i32 = arith.constant 0 : i32
    %c0_i32_0 = arith.constant 0 : i32
    %c0_i32_1 = arith.constant 0 : i32
    return %c0_i32, %c0_i32_0 : i32, i32
  }
  func.func @transform_2(%arg0: i32) -> (i32, i32) {
    %c0_i32 = arith.constant 0 : i32
    %c0_i32_0 = arith.constant 0 : i32
    %c0_i32_1 = arith.constant 0 : i32
    return %c0_i32, %c0_i32_0 : i32, i32
  }
  func.func @transform_3(%arg0: i32) -> (i32, i32) {
    %c0_i32 = arith.constant 0 : i32
    %c0_i32_0 = arith.constant 0 : i32
    %c0_i32_1 = arith.constant 0 : i32
    return %c0_i32, %c0_i32_0 : i32, i32
  }
  func.func @transform_4(%arg0: i32) -> (i32, i32) {
    %c0_i32 = arith.constant 0 : i32
    %c0_i32_0 = arith.constant 0 : i32
    %c0_i32_1 = arith.constant 0 : i32
    return %c0_i32, %c0_i32_0 : i32, i32
  }
  func.func @transform_5(%arg0: i32) -> (i32, i32, i32) {
    %c0_i32 = arith.constant 0 : i32
    %c0_i32_0 = arith.constant 0 : i32
    %c0_i32_1 = arith.constant 0 : i32
    return %arg0, %c0_i32, %c0_i32_0 : i32, i32, i32
  }
}

</mosaic_0001>

<llo_original>
// kernel: tpu_custom_call.1
$region0: #{tpu_custom_call.1}
  #allocation0 [shape = 'u32[]', space=smem, size = 0x4, offset = 0x4, fixed_abs, tag = 'smem constant byte address 0x4 - core index']
  #allocation1 [shape = 'u32[144,128]{1,0:T(1,128)}', space=vmem, size = 0x12000, scoped, tag = 'internal scratch']
  #allocation2 [shape = 'f32[8,896]{1,0:T(8,128)}', space=vmem, size = 0x7000, scoped, tag = 'scratch operand']
  #allocation3 [shape = 'f32[72,512]{1,0:T(8,128)}', space=vmem, size = 0x24000, scoped, tag = 'scratch operand']
  #allocation4 [shape = 'f32[8,896]{1,0:T(8,128)}', space=vmem, size = 0x7000, scoped, tag = 'scratch operand']
  #allocation5 [shape = 'f32[72,512]{1,0:T(8,128)}', space=vmem, size = 0x24000, scoped, tag = 'scratch operand']
  %s0 = inlined_call_operand.hbm [shape: f32[1,8,512], index: 0, kind: input, shape index: {}]
  %s1 = inlined_call_operand.vmem [shape: f32[8,4], index: 1, kind: input, shape index: {}]
  %s2 = inlined_call_operand.vmem [shape: f32[16,72], index: 2, kind: input, shape index: {}]
  %s3 = inlined_call_operand.hbm [shape: f32[8,72], index: 3, kind: input, shape index: {}]
  %s4 = inlined_call_operand.vmem [shape: f32[2,256], index: 4, kind: input, shape index: {}]
  %s5 = inlined_call_operand.hbm [shape: f32[1,8,512], index: 5, kind: output, shape index: {}]
  %s6 = sld [smem:[#allocation0]]
  $region38: #{tpu_custom_call.1} parent=0
    _
  %s8 = ssub.s32 1, %s6
  %s9 = scalar_select 0, %s8, %s6
  $region1: #{tpu_custom_call.1} parent=0
    #allocation6 [shape = 'u8[16384]{0}', space=vmem, size = 0x4000, scoped, tag = 'input window, operand 0, single buffered']
    #allocation7 [shape = 's32[1]{0}', space=sflag, size = 0x4, scoped, tag = 'scoped memory for tpu_custom_call.1']
    #allocation8 [shape = 's32[1]{0}', space=sflag, size = 0x4, scoped, tag = 'scoped memory for tpu_custom_call.1']
    #allocation9 [shape = 'u8[4096]{0}', space=vmem, size = 0x1000, scoped, tag = 'input window, operand 3, single buffered']
    #allocation10 [shape = 's32[1]{0}', space=sflag, size = 0x4, scoped, tag = 'scoped memory for tpu_custom_call.1']
    #allocation11 [shape = 'u8[16384]{0}', space=vmem, size = 0x4000, scoped, tag = 'output window, operand 0, single buffered']
    %10 = vsyncpa [#allocation7], 0
    %11 = vsyncpa [#allocation10], 0
    %12 = vsyncpa [#allocation8], 0
    // Predicated region
    $region2: #{tpu_custom_call.1} parent=1 // pred_check
      _
    $region3: #{tpu_custom_call.1} parent=1 // pred_check_branch
      %14 = sbr.rel (0) target = $region5
    $region4: #{tpu_custom_call.1} parent=1 // pred_region
      %s16 = ssub.s32 512, 512
      %17 = vsyncadd [#allocation7], %s16
      %s19 = sshll.u32 [#allocation6], 4
      %s20 = int_to_ptr.vmem [resolvable:$true] %s19
      %22 = dma.hbm_to_vmem [thread:$0]  %s0, 512, %s20, [#allocation7]
    $region5: #{tpu_custom_call.1} parent=1 // pred_fallthru
      _
    // Predicated region
    $region6: #{tpu_custom_call.1} parent=1 // pred_check
      _
    $region7: #{tpu_custom_call.1} parent=1 // pred_check_branch
      %24 = sbr.rel (0) target = $region9
    $region8: #{tpu_custom_call.1} parent=1 // pred_region
      _
    $region9: #{tpu_custom_call.1} parent=1 // pred_fallthru
      _
    // Predicated region
    $region10: #{tpu_custom_call.1} parent=1 // pred_check
      _
    $region11: #{tpu_custom_call.1} parent=1 // pred_check_branch
      %26 = sbr.rel (0) target = $region13
    $region12: #{tpu_custom_call.1} parent=1 // pred_region
      _
    $region13: #{tpu_custom_call.1} parent=1 // pred_fallthru
      _
    // Predicated region
    $region14: #{tpu_custom_call.1} parent=1 // pred_check
      _
    $region15: #{tpu_custom_call.1} parent=1 // pred_check_branch
      %28 = sbr.rel (0) target = $region17
    $region16: #{tpu_custom_call.1} parent=1 // pred_region
      %s30 = ssub.s32 128, 128
      %31 = vsyncadd [#allocation10], %s30
      %s33 = sshll.u32 [#allocation9], 4
      %s34 = int_to_ptr.vmem [resolvable:$true] %s33
      %36 = dma.hbm_to_vmem [thread:$0]  %s3, 128, %s34, [#allocation10]
    $region17: #{tpu_custom_call.1} parent=1 // pred_fallthru
      _
    // Predicated region
    $region18: #{tpu_custom_call.1} parent=1 // pred_check
      _
    $region19: #{tpu_custom_call.1} parent=1 // pred_check_branch
      %38 = sbr.rel (0) target = $region21
    $region20: #{tpu_custom_call.1} parent=1 // pred_region
      _
    $region21: #{tpu_custom_call.1} parent=1 // pred_fallthru
      _
    // Predicated region
    $region22: #{tpu_custom_call.1} parent=1 // pred_check
      _
    $region23: #{tpu_custom_call.1} parent=1 // pred_check_branch
      %40 = sbr.rel (0) target = $region25
    $region24: #{tpu_custom_call.1} parent=1 // pred_region
      %41 = dma.done [#allocation7], 512
    $region25: #{tpu_custom_call.1} parent=1 // pred_fallthru
      _
    // Predicated region
    $region26: #{tpu_custom_call.1} parent=1 // pred_check
      _
    $region27: #{tpu_custom_call.1} parent=1 // pred_check_branch
      %43 = sbr.rel (0) target = $region29
    $region28: #{tpu_custom_call.1} parent=1 // pred_region
      %44 = dma.done [#allocation10], 128
    $region29: #{tpu_custom_call.1} parent=1 // pred_fallthru
      _
    %v45 = vld [vmem:[%s4] ss:$2 sm:$0x3]
    %s46 = scalar_lea.vmem %s4, 1
    %v47 = vld [vmem:[%s46] ss:$2 sm:$0x3]
    %v48 = vld [vmem:[%s1] sm:$0xff]
    %v49 = vld [vmem:[#allocation6] sm:$0xff]
    %v50 = vld [vmem:[#allocation6 + $0x8] sm:$0xff]
    %v51 = vld [vmem:[#allocation6 + $0x10] sm:$0xff]
    %v52 = vld [vmem:[#allocation6 + $0x18] sm:$0xff]
    %54 = vset.pattern.permute.xlu0 0
    %55 = vperm.xlu0 %54, %v48
    %v56 = vpop.permute.xlu0 %55
    %v58 = vmul.f32 %v49, %v56
    %v59 = vmul.f32 %v50, %v56
    %v60 = vmul.f32 %v51, %v56
    %v61 = vmul.f32 %v52, %v56
    %62 = vset.pattern.permute.xlu0 1
    %63 = vperm.xlu0 %62, %v48
    %v64 = vpop.permute.xlu0 %63
    %v66 = vadd.f32 %v58, %v64
    %v67 = vadd.f32 %v59, %v64
    %v68 = vadd.f32 %v60, %v64
    %v69 = vadd.f32 %v61, %v64
    %v70 = vmax.f32 %v66, 0.0
    %v71 = vmax.f32 %v67, 0.0
    %v72 = vmax.f32 %v68, 0.0
    %v73 = vmax.f32 %v69, 0.0
    %v74 = vld [vmem:[%s2] sm:$0xff]
    %v75 = vld [vmem:[%s2 + $0x8] sm:$0xff]
    %76 = vst [vmem:[#allocation2] sm:$0xff] 0.0
    %77 = vst [vmem:[#allocation2 + $0x8] sm:$0xff] %v70
    %78 = vst [vmem:[#allocation2 + $0x10] sm:$0xff] %v71
    %79 = vst [vmem:[#allocation2 + $0x18] sm:$0xff] 0.0
    %80 = vst [vmem:[#allocation2 + $0x20] sm:$0xff] %v72
    %81 = vst [vmem:[#allocation2 + $0x28] sm:$0xff] %v73
    %82 = vst [vmem:[#allocation2 + $0x30] sm:$0xff] 0.0
    %83 = vst [vmem:[#allocation3 + $0x80] sm:$0xff] %v70
    %84 = vst [vmem:[#allocation3 + $0x88] sm:$0xff] %v71
    %85 = vst [vmem:[#allocation3 + $0x90] sm:$0xff] %v72
    %86 = vst [vmem:[#allocation3 + $0x98] sm:$0xff] %v73
    %v87 = vld [vmem:[#allocation2] sm:$0xff]
    %v88 = vld [vmem:[#allocation2 + $0x8] sm:$0xff]
    %v89 = vld [vmem:[#allocation2 + $0x10] sm:$0xff]
    %v91 = vlaneseq
    %v92 = vshrl.u32 %v91, 7
    %v93 = vsub.s32 0, %v92
    %v94 = vrot.slane %v45, %v93
    %v95 = vlaneseq
    %v96 = vshrl.u32 %v95, 7
    %v97 = vsub.s32 1, %v96
    %v98 = vrot.slane %v45, %v97
    %99 = vrot.lane.b32.xlu0 %v94, 111
    %v100 = vpop.permute.xlu0 %99
    %101 = vrot.lane.b32.xlu0 %v98, 111
    %v102 = vpop.permute.xlu0 %101
    %vm103 = vcmask 908288
    %v104 = vsel %vm103, %v100, %v102
    %v108 = vmul.f32 %v87, %v100
    %v109 = vmul.f32 %v88, %v104
    %v110 = vmul.f32 %v89, %v102
    %114 = vrot.lane.b32.xlu0 %v108, 17
    %v115 = vpop.permute.xlu0 %114
    %116 = vrot.lane.b32.xlu0 %v109, 17
    %v117 = vpop.permute.xlu0 %116
    %118 = vrot.lane.b32.xlu0 %v110, 17
    %v119 = vpop.permute.xlu0 %118
    %vm120 = vcmask 138240
    %v121 = vsel %vm120, %v115, %v117
    %v122 = vsel %vm120, %v117, %v119
    %125 = vst [vmem:[#allocation3] sm:$0xff] %v121
    %126 = vst [vmem:[#allocation3 + $0x8] sm:$0xff] %v122
    %v127 = vld [vmem:[#allocation2 + $0x18] sm:$0xff]
    %v128 = vld [vmem:[#allocation2 + $0x20] sm:$0xff]
    %v129 = vld [vmem:[#allocation2 + $0x28] sm:$0xff]
    %v130 = vmul.f32 %v127, %v100
    %v131 = vmul.f32 %v128, %v104
    %v132 = vmul.f32 %v129, %v102
    %136 = vrot.lane.b32.xlu0 %v130, 17
    %v137 = vpop.permute.xlu0 %136
    %138 = vrot.lane.b32.xlu0 %v131, 17
    %v139 = vpop.permute.xlu0 %138
    %140 = vrot.lane.b32.xlu0 %v132, 17
    %v141 = vpop.permute.xlu0 %140
    %v142 = vsel %vm120, %v137, %v139
    %v143 = vsel %vm120, %v139, %v141
    %146 = vst [vmem:[#allocation3 + $0x10] sm:$0xff] %v142
    %147 = vst [vmem:[#allocation3 + $0x18] sm:$0xff] %v143
    %v148 = vld [vmem:[#allocation2] sm:$0xff]
    %v149 = vld [vmem:[#allocation2 + $0x8] sm:$0xff]
    %v150 = vld [vmem:[#allocation2 + $0x10] sm:$0xff]
    %154 = vrot.lane.b32.xlu0 %v148, 16
    %v155 = vpop.permute.xlu0 %154
    %156 = vrot.lane.b32.xlu0 %v149, 16
    %v157 = vpop.permute.xlu0 %156
    %158 = vrot.lane.b32.xlu0 %v150, 16
    %v159 = vpop.permute.xlu0 %158
    %vm160 = vcmask 130048
    %v161 = vsel %vm160, %v155, %v157
    %v162 = vsel %vm160, %v157, %v159
    %165 = vst [vmem:[#allocation3 + $0x20] sm:$0xff] %v161
    %166 = vst [vmem:[#allocation3 + $0x28] sm:$0xff] %v162
    %v167 = vld [vmem:[#allocation2 + $0x18] sm:$0xff]
    %v168 = vld [vmem:[#allocation2 + $0x20] sm:$0xff]
    %v169 = vld [vmem:[#allocation2 + $0x28] sm:$0xff]
    %173 = vrot.lane.b32.xlu0 %v167, 16
    %v174 = vpop.permute.xlu0 %173
    %175 = vrot.lane.b32.xlu0 %v168, 16
    %v176 = vpop.permute.xlu0 %175
    %177 = vrot.lane.b32.xlu0 %v169, 16
    %v178 = vpop.permute.xlu0 %177
    %v179 = vsel %vm160, %v174, %v176
    %v180 = vsel %vm160, %v176, %v178
    %183 = vst [vmem:[#allocation3 + $0x30] sm:$0xff] %v179
    %184 = vst [vmem:[#allocation3 + $0x38] sm:$0xff] %v180
    %v185 = vld [vmem:[#allocation2] sm:$0xff]
    %v186 = vld [vmem:[#allocation2 + $0x8] sm:$0xff]
    %v187 = vld [vmem:[#allocation2 + $0x10] sm:$0xff]
    %v189 = vlaneseq
    %v190 = vshrl.u32 %v189, 7
    %v191 = vsub.s32 0, %v190
    %v192 = vrot.slane %v47, %v191
    %v193 = vlaneseq
    %v194 = vshrl.u32 %v193, 7
    %v195 = vsub.s32 1, %v194
    %v196 = vrot.slane %v47, %v195
    %197 = vrot.lane.b32.xlu0 %v192, 113
    %v198 = vpop.permute.xlu0 %197
    %199 = vrot.lane.b32.xlu0 %v196, 113
    %v200 = vpop.permute.xlu0 %199
    %vm201 = vcmask 924672
    %v202 = vsel %vm201, %v198, %v200
    %v206 = vmul.f32 %v185, %v198
    %v207 = vmul.f32 %v186, %v202
    %v208 = vmul.f32 %v187, %v200
    %212 = vrot.lane.b32.xlu0 %v206, 15
    %v213 = vpop.permute.xlu0 %212
    %214 = vrot.lane.b32.xlu0 %v207, 15
    %v215 = vpop.permute.xlu0 %214
    %216 = vrot.lane.b32.xlu0 %v208, 15
    %v217 = vpop.permute.xlu0 %216
    %vm218 = vcmask 121856
    %v219 = vsel %vm218, %v213, %v215
    %v220 = vsel %vm218, %v215, %v217
    %223 = vst [vmem:[#allocation3 + $0x40] sm:$0xff] %v219
    %224 = vst [vmem:[#allocation3 + $0x48] sm:$0xff] %v220
    %v225 = vld [vmem:[#allocation2 + $0x18] sm:$0xff]
    %v226 = vld [vmem:[#allocation2 + $0x20] sm:$0xff]
    %v227 = vld [vmem:[#allocation2 + $0x28] sm:$0xff]
    %v228 = vmul.f32 %v225, %v198
    %v229 = vmul.f32 %v226, %v202
    %v230 = vmul.f32 %v227, %v200
    %234 = vrot.lane.b32.xlu0 %v228, 15
    %v235 = vpop.permute.xlu0 %234
    %236 = vrot.lane.b32.xlu0 %v229, 15
    %v237 = vpop.permute.xlu0 %236
    %238 = vrot.lane.b32.xlu0 %v230, 15
    %v239 = vpop.permute.xlu0 %238
    %v240 = vsel %vm218, %v235, %v237
    %v241 = vsel %vm218, %v237, %v239
    %244 = vst [vmem:[#allocation3 + $0x50] sm:$0xff] %v240
    %245 = vst [vmem:[#allocation3 + $0x58] sm:$0xff] %v241
    %v246 = vld [vmem:[#allocation2] sm:$0xff]
    %v247 = vld [vmem:[#allocation2 + $0x8] sm:$0xff]
    %v248 = vld [vmem:[#allocation2 + $0x10] sm:$0xff]
    %249 = vrot.lane.b32.xlu0 %v94, 127
    %v250 = vpop.permute.xlu0 %249
    %251 = vrot.lane.b32.xlu0 %v98, 127
    %v252 = vpop.permute.xlu0 %251
    %vm253 = vcmask 1039360
    %v254 = vsel %vm253, %v250, %v252
    %v258 = vmul.f32 %v246, %v250
    %v259 = vmul.f32 %v247, %v254
    %v260 = vmul.f32 %v248, %v252
    %264 = vrot.lane.b32.xlu0 %v258, 1
    %v265 = vpop.permute.xlu0 %264
    %266 = vrot.lane.b32.xlu0 %v259, 1
    %v267 = vpop.permute.xlu0 %266
    %268 = vrot.lane.b32.xlu0 %v260, 1
    %v269 = vpop.permute.xlu0 %268
    %vm270 = vcmask 7168
    %v271 = vsel %vm270, %v265, %v267
    %v272 = vsel %vm270, %v267, %v269
    %275 = vst [vmem:[#allocation3 + $0x60] sm:$0xff] %v271
    %276 = vst [vmem:[#allocation3 + $0x68] sm:$0xff] %v272
    %v277 = vld [vmem:[#allocation2 + $0x18] sm:$0xff]
    %v278 = vld [vmem:[#allocation2 + $0x20] sm:$0xff]
    %v279 = vld [vmem:[#allocation2 + $0x28] sm:$0xff]
    %v280 = vmul.f32 %v277, %v250
    %v281 = vmul.f32 %v278, %v254
    %v282 = vmul.f32 %v279, %v252
    %286 = vrot.lane.b32.xlu0 %v280, 1
    %v287 = vpop.permute.xlu0 %286
    %288 = vrot.lane.b32.xlu0 %v281, 1
    %v289 = vpop.permute.xlu0 %288
    %290 = vrot.lane.b32.xlu0 %v282, 1
    %v291 = vpop.permute.xlu0 %290
    %v292 = vsel %vm270, %v287, %v289
    %v293 = vsel %vm270, %v289, %v291
    %296 = vst [vmem:[#allocation3 + $0x70] sm:$0xff] %v292
    %297 = vst [vmem:[#allocation3 + $0x78] sm:$0xff] %v293
    %v298 = vld [vmem:[#allocation2 + $0x8] sm:$0xff]
    %v299 = vld [vmem:[#allocation2 + $0x10] sm:$0xff]
    %v300 = vld [vmem:[#allocation2 + $0x18] sm:$0xff]
    %301 = vrot.lane.b32.xlu0 %v192, 1
    %v302 = vpop.permute.xlu0 %301
    %303 = vrot.lane.b32.xlu0 %v196, 1
    %v304 = vpop.permute.xlu0 %303
    %v305 = vsel %vm270, %v302, %v304
    %v309 = vmul.f32 %v298, %v302
    %v310 = vmul.f32 %v299, %v305
    %v311 = vmul.f32 %v300, %v304
    %315 = vrot.lane.b32.xlu0 %v309, 127
    %v316 = vpop.permute.xlu0 %315
    %317 = vrot.lane.b32.xlu0 %v310, 127
    %v318 = vpop.permute.xlu0 %317
    %319 = vrot.lane.b32.xlu0 %v311, 127
    %v320 = vpop.permute.xlu0 %319
    %v321 = vsel %vm253, %v316, %v318
    %v322 = vsel %vm253, %v318, %v320
    %325 = vst [vmem:[#allocation3 + $0xa0] sm:$0xff] %v321
    %326 = vst [vmem:[#allocation3 + $0xa8] sm:$0xff] %v322
    %v327 = vld [vmem:[#allocation2 + $0x20] sm:$0xff]
    %v328 = vld [vmem:[#allocation2 + $0x28] sm:$0xff]
    %v329 = vld [vmem:[#allocation2 + $0x30] sm:$0xff]
    %v330 = vmul.f32 %v327, %v302
    %v331 = vmul.f32 %v328, %v305
    %v332 = vmul.f32 %v329, %v304
    %336 = vrot.lane.b32.xlu0 %v330, 127
    %v337 = vpop.permute.xlu0 %336
    %338 = vrot.lane.b32.xlu0 %v331, 127
    %v339 = vpop.permute.xlu0 %338
    %340 = vrot.lane.b32.xlu0 %v332, 127
    %v341 = vpop.permute.xlu0 %340
    %v342 = vsel %vm253, %v337, %v339
    %v343 = vsel %vm253, %v339, %v341
    %346 = vst [vmem:[#allocation3 + $0xb0] sm:$0xff] %v342
    %347 = vst [vmem:[#allocation3 + $0xb8] sm:$0xff] %v343
    %v348 = vld [vmem:[#allocation2 + $0x8] sm:$0xff]
    %v349 = vld [vmem:[#allocation2 + $0x10] sm:$0xff]
    %v350 = vld [vmem:[#allocation2 + $0x18] sm:$0xff]
    %351 = vrot.lane.b32.xlu0 %v94, 15
    %v352 = vpop.permute.xlu0 %351
    %353 = vrot.lane.b32.xlu0 %v98, 15
    %v354 = vpop.permute.xlu0 %353
    %v355 = vsel %vm218, %v352, %v354
    %v359 = vmul.f32 %v348, %v352
    %v360 = vmul.f32 %v349, %v355
    %v361 = vmul.f32 %v350, %v354
    %365 = vrot.lane.b32.xlu0 %v359, 113
    %v366 = vpop.permute.xlu0 %365
    %367 = vrot.lane.b32.xlu0 %v360, 113
    %v368 = vpop.permute.xlu0 %367
    %369 = vrot.lane.b32.xlu0 %v361, 113
    %v370 = vpop.permute.xlu0 %369
    %v371 = vsel %vm201, %v366, %v368
    %v372 = vsel %vm201, %v368, %v370
    %375 = vst [vmem:[#allocation3 + $0xc0] sm:$0xff] %v371
    %376 = vst [vmem:[#allocation3 + $0xc8] sm:$0xff] %v372
    %v377 = vld [vmem:[#allocation2 + $0x20] sm:$0xff]
    %v378 = vld [vmem:[#allocation2 + $0x28] sm:$0xff]
    %v379 = vld [vmem:[#allocation2 + $0x30] sm:$0xff]
    %v380 = vmul.f32 %v377, %v352
    %v381 = vmul.f32 %v378, %v355
    %v382 = vmul.f32 %v379, %v354
    %386 = vrot.lane.b32.xlu0 %v380, 113
    %v387 = vpop.permute.xlu0 %386
    %388 = vrot.lane.b32.xlu0 %v381, 113
    %v389 = vpop.permute.xlu0 %388
    %390 = vrot.lane.b32.xlu0 %v382, 113
    %v391 = vpop.permute.xlu0 %390
    %v392 = vsel %vm201, %v387, %v389
    %v393 = vsel %vm201, %v389, %v391
    %396 = vst [vmem:[#allocation3 + $0xd0] sm:$0xff] %v392
    %397 = vst [vmem:[#allocation3 + $0xd8] sm:$0xff] %v393
    %v398 = vld [vmem:[#allocation2 + $0x8] sm:$0xff]
    %v399 = vld [vmem:[#allocation2 + $0x10] sm:$0xff]
    %v400 = vld [vmem:[#allocation2 + $0x18] sm:$0xff]
    %404 = vrot.lane.b32.xlu0 %v398, 112
    %v405 = vpop.permute.xlu0 %404
    %406 = vrot.lane.b32.xlu0 %v399, 112
    %v407 = vpop.permute.xlu0 %406
    %408 = vrot.lane.b32.xlu0 %v400, 112
    %v409 = vpop.permute.xlu0 %408
    %vm410 = vcmask 916480
    %v411 = vsel %vm410, %v405, %v407
    %v412 = vsel %vm410, %v407, %v409
    %415 = vst [vmem:[#allocation3 + $0xe0] sm:$0xff] %v411
    %416 = vst [vmem:[#allocation3 + $0xe8] sm:$0xff] %v412
    %v417 = vld [vmem:[#allocation2 + $0x20] sm:$0xff]
    %v418 = vld [vmem:[#allocation2 + $0x28] sm:$0xff]
    %v419 = vld [vmem:[#allocation2 + $0x30] sm:$0xff]
    %423 = vrot.lane.b32.xlu0 %v417, 112
    %v424 = vpop.permute.xlu0 %423
    %425 = vrot.lane.b32.xlu0 %v418, 112
    %v426 = vpop.permute.xlu0 %425
    %427 = vrot.lane.b32.xlu0 %v419, 112
    %v428 = vpop.permute.xlu0 %427
    %v429 = vsel %vm410, %v424, %v426
    %v430 = vsel %vm410, %v426, %v428
    %433 = vst [vmem:[#allocation3 + $0xf0] sm:$0xff] %v429
    %434 = vst [vmem:[#allocation3 + $0xf8] sm:$0xff] %v430
    %v435 = vld [vmem:[#allocation2 + $0x8] sm:$0xff]
    %v436 = vld [vmem:[#allocation2 + $0x10] sm:$0xff]
    %v437 = vld [vmem:[#allocation2 + $0x18] sm:$0xff]
    %438 = vrot.lane.b32.xlu0 %v192, 17
    %v439 = vpop.permute.xlu0 %438
    %440 = vrot.lane.b32.xlu0 %v196, 17
    %v441 = vpop.permute.xlu0 %440
    %v442 = vsel %vm120, %v439, %v441
    %v446 = vmul.f32 %v435, %v439
    %v447 = vmul.f32 %v436, %v442
    %v448 = vmul.f32 %v437, %v441
    %452 = vrot.lane.b32.xlu0 %v446, 111
    %v453 = vpop.permute.xlu0 %452
    %454 = vrot.lane.b32.xlu0 %v447, 111
    %v455 = vpop.permute.xlu0 %454
    %456 = vrot.lane.b32.xlu0 %v448, 111
    %v457 = vpop.permute.xlu0 %456
    %v458 = vsel %vm103, %v453, %v455
    %v459 = vsel %vm103, %v455, %v457
    %462 = vst [vmem:[#allocation3 + $0x100] sm:$0xff] %v458
    %463 = vst [vmem:[#allocation3 + $0x108] sm:$0xff] %v459
    %v464 = vld [vmem:[#allocation2 + $0x20] sm:$0xff]
    %v465 = vld [vmem:[#allocation2 + $0x28] sm:$0xff]
    %v466 = vld [vmem:[#allocation2 + $0x30] sm:$0xff]
    %v467 = vmul.f32 %v464, %v439
    %v468 = vmul.f32 %v465, %v442
    %v469 = vmul.f32 %v466, %v441
    %473 = vrot.lane.b32.xlu0 %v467, 111
    %v474 = vpop.permute.xlu0 %473
    %475 = vrot.lane.b32.xlu0 %v468, 111
    %v476 = vpop.permute.xlu0 %475
    %477 = vrot.lane.b32.xlu0 %v469, 111
    %v478 = vpop.permute.xlu0 %477
    %v479 = vsel %vm103, %v474, %v476
    %v480 = vsel %vm103, %v476, %v478
    %483 = vst [vmem:[#allocation3 + $0x110] sm:$0xff] %v479
    %484 = vst [vmem:[#allocation3 + $0x118] sm:$0xff] %v480
    %v485 = vld [vmem:[#allocation3] sm:$0xff]
    %v486 = vld [vmem:[#allocation3 + $0x8] sm:$0xff]
    %v487 = vld [vmem:[#allocation3 + $0x10] sm:$0xff]
    %v488 = vld [vmem:[#allocation3 + $0x18] sm:$0xff]
    %v489 = vld [vmem:[#allocation3 + $0x20] sm:$0xff]
    %v490 = vld [vmem:[#allocation3 + $0x28] sm:$0xff]
    %v491 = vld [vmem:[#allocation3 + $0x30] sm:$0xff]
    %v492 = vld [vmem:[#allocation3 + $0x38] sm:$0xff]
    %v493 = vld [vmem:[#allocation3 + $0x40] sm:$0xff]
    %v494 = vld [vmem:[#allocation3 + $0x48] sm:$0xff]
    %v495 = vld [vmem:[#allocation3 + $0x50] sm:$0xff]
    %v496 = vld [vmem:[#allocation3 + $0x58] sm:$0xff]
    %v497 = vld [vmem:[#allocation3 + $0x60] sm:$0xff]
    %v498 = vld [vmem:[#allocation3 + $0x68] sm:$0xff]
    %v499 = vld [vmem:[#allocation3 + $0x70] sm:$0xff]
    %v500 = vld [vmem:[#allocation3 + $0x78] sm:$0xff]
    %v501 = vld [vmem:[#allocation3 + $0x80] sm:$0xff]
    %v502 = vld [vmem:[#allocation3 + $0x88] sm:$0xff]
    %v503 = vld [vmem:[#allocation3 + $0x90] sm:$0xff]
    %v504 = vld [vmem:[#allocation3 + $0x98] sm:$0xff]
    %v505 = vld [vmem:[#allocation3 + $0xa0] sm:$0xff]
    %v506 = vld [vmem:[#allocation3 + $0xa8] sm:$0xff]
    %v507 = vld [vmem:[#allocation3 + $0xb0] sm:$0xff]
    %v508 = vld [vmem:[#allocation3 + $0xb8] sm:$0xff]
    %v509 = vld [vmem:[#allocation3 + $0xc0] sm:$0xff]
    %v510 = vld [vmem:[#allocation3 + $0xc8] sm:$0xff]
    %v511 = vld [vmem:[#allocation3 + $0xd0] sm:$0xff]
    %v512 = vld [vmem:[#allocation3 + $0xd8] sm:$0xff]
    %v513 = vld [vmem:[#allocation3 + $0xe0] sm:$0xff]
    %v514 = vld [vmem:[#allocation3 + $0xe8] sm:$0xff]
    %v515 = vld [vmem:[#allocation3 + $0xf0] sm:$0xff]
    %v516 = vld [vmem:[#allocation3 + $0xf8] sm:$0xff]
    %v517 = vld [vmem:[#allocation3 + $0x100] sm:$0xff]
    %v518 = vld [vmem:[#allocation3 + $0x108] sm:$0xff]
    %v519 = vld [vmem:[#allocation3 + $0x110] sm:$0xff]
    %v520 = vld [vmem:[#allocation3 + $0x118] sm:$0xff]
    %vm521 = vcmask 588800
    %v523 = vsel %vm521, %v74, 0
    %v526 = vsel %vm521, %v75, 0
    %528 = vmatprep.subr.mxu0 %v486
    %529 = vmatpush1.msra.mxu0 %v485
    %530 = vmatprep.subr.mxu0 %v490
    %531 = vmatpush1.msra.mxu0 %v489
    %532 = vmatprep.subr.mxu0 %v494
    %533 = vmatpush1.msra.mxu0 %v493
    %534 = vmatprep.subr.mxu0 %v498
    %535 = vmatpush1.msra.mxu0 %v497
    %536 = vmatprep.subr.mxu0 %v502
    %537 = vmatpush1.msra.mxu0 %v501
    %538 = vmatprep.subr.mxu0 %v506
    %539 = vmatpush1.msra.mxu0 %v505
    %540 = vmatprep.subr.mxu0 %v510
    %541 = vmatpush1.msra.mxu0 %v509
    %542 = vmatprep.subr.mxu0 %v514
    %543 = vmatpush1.msra.mxu0 %v513
    %544 = vmatprep.subr.mxu0 %v518
    %545 = vmatpush1.msra.mxu0 %v517
    %546 = vmatprep.subr.mxu0 0.0
    %547 = vmatpush1.msra.mxu0 0.0
    %548 = vmatprep.subr.mxu0 0.0
    %549 = vmatpush1.msra.mxu0 0.0
    %550 = vmatprep.subr.mxu0 0.0
    %551 = vmatpush1.msra.mxu0 0.0
    %552 = vmatprep.subr.mxu0 0.0
    %553 = vmatpush1.msra.mxu0 0.0
    %554 = vmatprep.subr.mxu0 0.0
    %555 = vmatpush1.msra.mxu0 0.0
    %556 = vmatprep.subr.mxu0 0.0
    %557 = vmatpush1.msra.mxu0 0.0
    %558 = vmatprep.subr.mxu0 0.0
    %559 = vmatpush1.msra.mxu0 0.0
    %560 = vmatprep.subr.mxu0 0.0
    %561 = vmatpush1.msra.mxu0 0.0
    %562 = vmatprep.subr.mxu0 0.0
    %563 = vmatpush1.msra.mxu0 0.0
    %564 = vmatprep.subr.mxu0 0.0
    %565 = vmatpush1.msra.mxu0 0.0
    %566 = vmatprep.subr.mxu0 0.0
    %567 = vmatpush1.msra.mxu0 0.0
    %568 = vmatprep.subr.mxu0 0.0
    %569 = vmatpush1.msra.mxu0 0.0
    %570 = vmatprep.subr.mxu0 0.0
    %571 = vmatpush1.msra.mxu0 0.0
    %572 = vmatprep.subr.mxu0 0.0
    %573 = vmatpush1.msra.mxu0 0.0
    %574 = vmatprep.subr.mxu0 0.0
    %575 = vmatpush1.msra.mxu0 0.0
    %576 = vmatprep.subr.mxu0 0.0
    %577 = vmatpush1.msra.mxu0 0.0
    %578 = vmatprep.subr.mxu0 0.0
    %579 = vmatpush1.msra.mxu0 0.0
    %580 = vmatprep.subr.mxu0 0.0
    %581 = vmatpush1.msra.mxu0 0.0
    %582 = vmatprep.subr.mxu0 0.0
    %583 = vmatpush1.msra.mxu0 0.0
    %584 = vmatprep.subr.mxu0 0.0
    %585 = vmatpush1.msra.mxu0 0.0
    %586 = vmatprep.subr.mxu0 0.0
    %587 = vmatpush1.msra.mxu0 0.0
    %588 = vmatprep.subr.mxu0 0.0
    %589 = vmatpush1.msra.mxu0 0.0
    %590 = vmatprep.subr.mxu0 0.0
    %591 = vmatpush1.msra.mxu0 0.0
    %592 = vmatprep.mubr.f32.mxu0 0.0
    %593 = vmatmul.mubr.f32.gmra.mrb[0].mxu0 %v523
    %v594 = vpop.f32.mrb[0].mxu0
    %v595 = vadd.f32 0.0, %v594
    %v596 = vpop.f32.mrb[0].mxu0
    %v597 = vadd.f32 0.0, %v596
    %598 = vmatprep.mubr.f32.mxu0 0.0
    %599 = vmatmul.mubr.f32.gmra.mrb[0].mxu0 %v526
    %v600 = vpop.f32.mrb[0].mxu0
    %v601 = vadd.f32 0.0, %v600
    %v602 = vpop.f32.mrb[0].mxu0
    %v603 = vadd.f32 0.0, %v602
    %604 = vdwg.mxu0
    %605 = vmatprep.subr.mxu0 %v488
    %606 = vmatpush1.msra.mxu0 %v487
    %607 = vmatprep.subr.mxu0 %v492
    %608 = vmatpush1.msra.mxu0 %v491
    %609 = vmatprep.subr.mxu0 %v496
    %610 = vmatpush1.msra.mxu0 %v495
    %611 = vmatprep.subr.mxu0 %v500
    %612 = vmatpush1.msra.mxu0 %v499
    %613 = vmatprep.subr.mxu0 %v504
    %614 = vmatpush1.msra.mxu0 %v503
    %615 = vmatprep.subr.mxu0 %v508
    %616 = vmatpush1.msra.mxu0 %v507
    %617 = vmatprep.subr.mxu0 %v512
    %618 = vmatpush1.msra.mxu0 %v511
    %619 = vmatprep.subr.mxu0 %v516
    %620 = vmatpush1.msra.mxu0 %v515
    %621 = vmatprep.subr.mxu0 %v520
    %622 = vmatpush1.msra.mxu0 %v519
    %623 = vmatprep.subr.mxu0 0.0
    %624 = vmatpush1.msra.mxu0 0.0
    %625 = vmatprep.subr.mxu0 0.0
    %626 = vmatpush1.msra.mxu0 0.0
    %627 = vmatprep.subr.mxu0 0.0
    %628 = vmatpush1.msra.mxu0 0.0
    %629 = vmatprep.subr.mxu0 0.0
    %630 = vmatpush1.msra.mxu0 0.0
    %631 = vmatprep.subr.mxu0 0.0
    %632 = vmatpush1.msra.mxu0 0.0
    %633 = vmatprep.subr.mxu0 0.0
    %634 = vmatpush1.msra.mxu0 0.0
    %635 = vmatprep.subr.mxu0 0.0
    %636 = vmatpush1.msra.mxu0 0.0
    %637 = vmatprep.subr.mxu0 0.0
    %638 = vmatpush1.msra.mxu0 0.0
    %639 = vmatprep.subr.mxu0 0.0
    %640 = vmatpush1.msra.mxu0 0.0
    %641 = vmatprep.subr.mxu0 0.0
    %642 = vmatpush1.msra.mxu0 0.0
    %643 = vmatprep.subr.mxu0 0.0
    %644 = vmatpush1.msra.mxu0 0.0
    %645 = vmatprep.subr.mxu0 0.0
    %646 = vmatpush1.msra.mxu0 0.0
    %647 = vmatprep.subr.mxu0 0.0
    %648 = vmatpush1.msra.mxu0 0.0
    %649 = vmatprep.subr.mxu0 0.0
    %650 = vmatpush1.msra.mxu0 0.0
    %651 = vmatprep.subr.mxu0 0.0
    %652 = vmatpush1.msra.mxu0 0.0
    %653 = vmatprep.subr.mxu0 0.0
    %654 = vmatpush1.msra.mxu0 0.0
    %655 = vmatprep.subr.mxu0 0.0
    %656 = vmatpush1.msra.mxu0 0.0
    %657 = vmatprep.subr.mxu0 0.0
    %658 = vmatpush1.msra.mxu0 0.0
    %659 = vmatprep.subr.mxu0 0.0
    %660 = vmatpush1.msra.mxu0 0.0
    %661 = vmatprep.subr.mxu0 0.0
    %662 = vmatpush1.msra.mxu0 0.0
    %663 = vmatprep.subr.mxu0 0.0
    %664 = vmatpush1.msra.mxu0 0.0
    %665 = vmatprep.subr.mxu0 0.0
    %666 = vmatpush1.msra.mxu0 0.0
    %667 = vmatprep.subr.mxu0 0.0
    %668 = vmatpush1.msra.mxu0 0.0
    %669 = vmatprep.mubr.f32.mxu0 0.0
    %670 = vmatmul.mubr.f32.gmra.mrb[0].mxu0 %v523
    %v671 = vpop.f32.mrb[0].mxu0
    %v672 = vadd.f32 0.0, %v671
    %v673 = vpop.f32.mrb[0].mxu0
    %v674 = vadd.f32 0.0, %v673
    %675 = vmatprep.mubr.f32.mxu0 0.0
    %676 = vmatmul.mubr.f32.gmra.mrb[0].mxu0 %v526
    %v677 = vpop.f32.mrb[0].mxu0
    %v678 = vadd.f32 0.0, %v677
    %v679 = vpop.f32.mrb[0].mxu0
    %v680 = vadd.f32 0.0, %v679
    %681 = vdwg.mxu0
    %682 = vset.pattern.permute.xlu0 2
    %683 = vperm.xlu0 %682, %v48
    %v684 = vpop.permute.xlu0 %683
    %v686 = vadd.f32 %v595, %v684
    %v687 = vadd.f32 %v597, %v684
    %v688 = vadd.f32 %v672, %v684
    %v689 = vadd.f32 %v674, %v684
    %v690 = vmax.f32 %v686, 0.0
    %v691 = vmax.f32 %v687, 0.0
    %v692 = vmax.f32 %v688, 0.0
    %v693 = vmax.f32 %v689, 0.0
    %v694 = vld [vmem:[#allocation9] sm:$0xff]
    %695 = vst [vmem:[#allocation4] sm:$0xff] 0.0
    %696 = vst [vmem:[#allocation4 + $0x8] sm:$0xff] %v690
    %697 = vst [vmem:[#allocation4 + $0x10] sm:$0xff] %v691
    %698 = vst [vmem:[#allocation4 + $0x18] sm:$0xff] 0.0
    %699 = vst [vmem:[#allocation4 + $0x20] sm:$0xff] %v692
    %700 = vst [vmem:[#allocation4 + $0x28] sm:$0xff] %v693
    %701 = vst [vmem:[#allocation4 + $0x30] sm:$0xff] 0.0
    %702 = vst [vmem:[#allocation5 + $0x80] sm:$0xff] %v690
    %703 = vst [vmem:[#allocation5 + $0x88] sm:$0xff] %v691
    %704 = vst [vmem:[#allocation5 + $0x90] sm:$0xff] %v692
    %705 = vst [vmem:[#allocation5 + $0x98] sm:$0xff] %v693
    %v706 = vld [vmem:[#allocation4] sm:$0xff]
    %v707 = vld [vmem:[#allocation4 + $0x8] sm:$0xff]
    %v708 = vld [vmem:[#allocation4 + $0x10] sm:$0xff]
    %v709 = vmul.f32 %v706, %v100
    %v710 = vmul.f32 %v707, %v104
    %v711 = vmul.f32 %v708, %v102
    %715 = vrot.lane.b32.xlu0 %v709, 17
    %v716 = vpop.permute.xlu0 %715
    %717 = vrot.lane.b32.xlu0 %v710, 17
    %v718 = vpop.permute.xlu0 %717
    %719 = vrot.lane.b32.xlu0 %v711, 17
    %v720 = vpop.permute.xlu0 %719
    %v721 = vsel %vm120, %v716, %v718
    %v722 = vsel %vm120, %v718, %v720
    %725 = vst [vmem:[#allocation5] sm:$0xff] %v721
    %726 = vst [vmem:[#allocation5 + $0x8] sm:$0xff] %v722
    %v727 = vld [vmem:[#allocation4 + $0x18] sm:$0xff]
    %v728 = vld [vmem:[#allocation4 + $0x20] sm:$0xff]
    %v729 = vld [vmem:[#allocation4 + $0x28] sm:$0xff]
    %v730 = vmul.f32 %v727, %v100
    %v731 = vmul.f32 %v728, %v104
    %v732 = vmul.f32 %v729, %v102
    %736 = vrot.lane.b32.xlu0 %v730, 17
    %v737 = vpop.permute.xlu0 %736
    %738 = vrot.lane.b32.xlu0 %v731, 17
    %v739 = vpop.permute.xlu0 %738
    %740 = vrot.lane.b32.xlu0 %v732, 17
    %v741 = vpop.permute.xlu0 %740
    %v742 = vsel %vm120, %v737, %v739
    %v743 = vsel %vm120, %v739, %v741
    %746 = vst [vmem:[#allocation5 + $0x10] sm:$0xff] %v742
    %747 = vst [vmem:[#allocation5 + $0x18] sm:$0xff] %v743
    %v748 = vld [vmem:[#allocation4] sm:$0xff]
    %v749 = vld [vmem:[#allocation4 + $0x8] sm:$0xff]
    %v750 = vld [vmem:[#allocation4 + $0x10] sm:$0xff]
    %754 = vrot.lane.b32.xlu0 %v748, 16
    %v755 = vpop.permute.xlu0 %754
    %756 = vrot.lane.b32.xlu0 %v749, 16
    %v757 = vpop.permute.xlu0 %756
    %758 = vrot.lane.b32.xlu0 %v750, 16
    %v759 = vpop.permute.xlu0 %758
    %v760 = vsel %vm160, %v755, %v757
    %v761 = vsel %vm160, %v757, %v759
    %764 = vst [vmem:[#allocation5 + $0x20] sm:$0xff] %v760
    %765 = vst [vmem:[#allocation5 + $0x28] sm:$0xff] %v761
    %v766 = vld [vmem:[#allocation4 + $0x18] sm:$0xff]
    %v767 = vld [vmem:[#allocation4 + $0x20] sm:$0xff]
    %v768 = vld [vmem:[#allocation4 + $0x28] sm:$0xff]
    %772 = vrot.lane.b32.xlu0 %v766, 16
    %v773 = vpop.permute.xlu0 %772
    %774 = vrot.lane.b32.xlu0 %v767, 16
    %v775 = vpop.permute.xlu0 %774
    %776 = vrot.lane.b32.xlu0 %v768, 16
    %v777 = vpop.permute.xlu0 %776
    %v778 = vsel %vm160, %v773, %v775
    %v779 = vsel %vm160, %v775, %v777
    %782 = vst [vmem:[#allocation5 + $0x30] sm:$0xff] %v778
    %783 = vst [vmem:[#allocation5 + $0x38] sm:$0xff] %v779
    %v784 = vld [vmem:[#allocation4] sm:$0xff]
    %v785 = vld [vmem:[#allocation4 + $0x8] sm:$0xff]
    %v786 = vld [vmem:[#allocation4 + $0x10] sm:$0xff]
    %v787 = vmul.f32 %v784, %v198
    %v788 = vmul.f32 %v785, %v202
    %v789 = vmul.f32 %v786, %v200
    %793 = vrot.lane.b32.xlu0 %v787, 15
    %v794 = vpop.permute.xlu0 %793
    %795 = vrot.lane.b32.xlu0 %v788, 15
    %v796 = vpop.permute.xlu0 %795
    %797 = vrot.lane.b32.xlu0 %v789, 15
    %v798 = vpop.permute.xlu0 %797
    %v799 = vsel %vm218, %v794, %v796
    %v800 = vsel %vm218, %v796, %v798
    %803 = vst [vmem:[#allocation5 + $0x40] sm:$0xff] %v799
    %804 = vst [vmem:[#allocation5 + $0x48] sm:$0xff] %v800
    %v805 = vld [vmem:[#allocation4 + $0x18] sm:$0xff]
    %v806 = vld [vmem:[#allocation4 + $0x20] sm:$0xff]
    %v807 = vld [vmem:[#allocation4 + $0x28] sm:$0xff]
    %v808 = vmul.f32 %v805, %v198
    %v809 = vmul.f32 %v806, %v202
    %v810 = vmul.f32 %v807, %v200
    %814 = vrot.lane.b32.xlu0 %v808, 15
    %v815 = vpop.permute.xlu0 %814
    %816 = vrot.lane.b32.xlu0 %v809, 15
    %v817 = vpop.permute.xlu0 %816
    %818 = vrot.lane.b32.xlu0 %v810, 15
    %v819 = vpop.permute.xlu0 %818
    %v820 = vsel %vm218, %v815, %v817
    %v821 = vsel %vm218, %v817, %v819
    %824 = vst [vmem:[#allocation5 + $0x50] sm:$0xff] %v820
    %825 = vst [vmem:[#allocation5 + $0x58] sm:$0xff] %v821
    %v826 = vld [vmem:[#allocation4] sm:$0xff]
    %v827 = vld [vmem:[#allocation4 + $0x8] sm:$0xff]
    %v828 = vld [vmem:[#allocation4 + $0x10] sm:$0xff]
    %v829 = vmul.f32 %v826, %v250
    %v830 = vmul.f32 %v827, %v254
    %v831 = vmul.f32 %v828, %v252
    %835 = vrot.lane.b32.xlu0 %v829, 1
    %v836 = vpop.permute.xlu0 %835
    %837 = vrot.lane.b32.xlu0 %v830, 1
    %v838 = vpop.permute.xlu0 %837
    %839 = vrot.lane.b32.xlu0 %v831, 1
    %v840 = vpop.permute.xlu0 %839
    %v841 = vsel %vm270, %v836, %v838
    %v842 = vsel %vm270, %v838, %v840
    %845 = vst [vmem:[#allocation5 + $0x60] sm:$0xff] %v841
    %846 = vst [vmem:[#allocation5 + $0x68] sm:$0xff] %v842
    %v847 = vld [vmem:[#allocation4 + $0x18] sm:$0xff]
    %v848 = vld [vmem:[#allocation4 + $0x20] sm:$0xff]
    %v849 = vld [vmem:[#allocation4 + $0x28] sm:$0xff]
    %v850 = vmul.f32 %v847, %v250
    %v851 = vmul.f32 %v848, %v254
    %v852 = vmul.f32 %v849, %v252
    %856 = vrot.lane.b32.xlu0 %v850, 1
    %v857 = vpop.permute.xlu0 %856
    %858 = vrot.lane.b32.xlu0 %v851, 1
    %v859 = vpop.permute.xlu0 %858
    %860 = vrot.lane.b32.xlu0 %v852, 1
    %v861 = vpop.permute.xlu0 %860
    %v862 = vsel %vm270, %v857, %v859
    %v863 = vsel %vm270, %v859, %v861
    %866 = vst [vmem:[#allocation5 + $0x70] sm:$0xff] %v862
    %867 = vst [vmem:[#allocation5 + $0x78] sm:$0xff] %v863
    %v868 = vld [vmem:[#allocation4 + $0x8] sm:$0xff]
    %v869 = vld [vmem:[#allocation4 + $0x10] sm:$0xff]
    %v870 = vld [vmem:[#allocation4 + $0x18] sm:$0xff]
    %v871 = vmul.f32 %v868, %v302
    %v872 = vmul.f32 %v869, %v305
    %v873 = vmul.f32 %v870, %v304
    %877 = vrot.lane.b32.xlu0 %v871, 127
    %v878 = vpop.permute.xlu0 %877
    %879 = vrot.lane.b32.xlu0 %v872, 127
    %v880 = vpop.permute.xlu0 %879
    %881 = vrot.lane.b32.xlu0 %v873, 127
    %v882 = vpop.permute.xlu0 %881
    %v883 = vsel %vm253, %v878, %v880
    %v884 = vsel %vm253, %v880, %v882
    %887 = vst [vmem:[#allocation5 + $0xa0] sm:$0xff] %v883
    %888 = vst [vmem:[#allocation5 + $0xa8] sm:$0xff] %v884
    %v889 = vld [vmem:[#allocation4 + $0x20] sm:$0xff]
    %v890 = vld [vmem:[#allocation4 + $0x28] sm:$0xff]
    %v891 = vld [vmem:[#allocation4 + $0x30] sm:$0xff]
    %v892 = vmul.f32 %v889, %v302
    %v893 = vmul.f32 %v890, %v305
    %v894 = vmul.f32 %v891, %v304
    %898 = vrot.lane.b32.xlu0 %v892, 127
    %v899 = vpop.permute.xlu0 %898
    %900 = vrot.lane.b32.xlu0 %v893, 127
    %v901 = vpop.permute.xlu0 %900
    %902 = vrot.lane.b32.xlu0 %v894, 127
    %v903 = vpop.permute.xlu0 %902
    %v904 = vsel %vm253, %v899, %v901
    %v905 = vsel %vm253, %v901, %v903
    %908 = vst [vmem:[#allocation5 + $0xb0] sm:$0xff] %v904
    %909 = vst [vmem:[#allocation5 + $0xb8] sm:$0xff] %v905
    %v910 = vld [vmem:[#allocation4 + $0x8] sm:$0xff]
    %v911 = vld [vmem:[#allocation4 + $0x10] sm:$0xff]
    %v912 = vld [vmem:[#allocation4 + $0x18] sm:$0xff]
    %v913 = vmul.f32 %v910, %v352
    %v914 = vmul.f32 %v911, %v355
    %v915 = vmul.f32 %v912, %v354
    %919 = vrot.lane.b32.xlu0 %v913, 113
    %v920 = vpop.permute.xlu0 %919
    %921 = vrot.lane.b32.xlu0 %v914, 113
    %v922 = vpop.permute.xlu0 %921
    %923 = vrot.lane.b32.xlu0 %v915, 113
    %v924 = vpop.permute.xlu0 %923
    %v925 = vsel %vm201, %v920, %v922
    %v926 = vsel %vm201, %v922, %v924
    %929 = vst [vmem:[#allocation5 + $0xc0] sm:$0xff] %v925
    %930 = vst [vmem:[#allocation5 + $0xc8] sm:$0xff] %v926
    %v931 = vld [vmem:[#allocation4 + $0x20] sm:$0xff]
    %v932 = vld [vmem:[#allocation4 + $0x28] sm:$0xff]
    %v933 = vld [vmem:[#allocation4 + $0x30] sm:$0xff]
    %v934 = vmul.f32 %v931, %v352
    %v935 = vmul.f32 %v932, %v355
    %v936 = vmul.f32 %v933, %v354
    %940 = vrot.lane.b32.xlu0 %v934, 113
    %v941 = vpop.permute.xlu0 %940
    %942 = vrot.lane.b32.xlu0 %v935, 113
    %v943 = vpop.permute.xlu0 %942
    %944 = vrot.lane.b32.xlu0 %v936, 113
    %v945 = vpop.permute.xlu0 %944
    %v946 = vsel %vm201, %v941, %v943
    %v947 = vsel %vm201, %v943, %v945
    %950 = vst [vmem:[#allocation5 + $0xd0] sm:$0xff] %v946
    %951 = vst [vmem:[#allocation5 + $0xd8] sm:$0xff] %v947
    %v952 = vld [vmem:[#allocation4 + $0x8] sm:$0xff]
    %v953 = vld [vmem:[#allocation4 + $0x10] sm:$0xff]
    %v954 = vld [vmem:[#allocation4 + $0x18] sm:$0xff]
    %958 = vrot.lane.b32.xlu0 %v952, 112
    %v959 = vpop.permute.xlu0 %958
    %960 = vrot.lane.b32.xlu0 %v953, 112
    %v961 = vpop.permute.xlu0 %960
    %962 = vrot.lane.b32.xlu0 %v954, 112
    %v963 = vpop.permute.xlu0 %962
    %v964 = vsel %vm410, %v959, %v961
    %v965 = vsel %vm410, %v961, %v963
    %968 = vst [vmem:[#allocation5 + $0xe0] sm:$0xff] %v964
    %969 = vst [vmem:[#allocation5 + $0xe8] sm:$0xff] %v965
    %v970 = vld [vmem:[#allocation4 + $0x20] sm:$0xff]
    %v971 = vld [vmem:[#allocation4 + $0x28] sm:$0xff]
    %v972 = vld [vmem:[#allocation4 + $0x30] sm:$0xff]
    %976 = vrot.lane.b32.xlu0 %v970, 112
    %v977 = vpop.permute.xlu0 %976
    %978 = vrot.lane.b32.xlu0 %v971, 112
    %v979 = vpop.permute.xlu0 %978
    %980 = vrot.lane.b32.xlu0 %v972, 112
    %v981 = vpop.permute.xlu0 %980
    %v982 = vsel %vm410, %v977, %v979
    %v983 = vsel %vm410, %v979, %v981
    %986 = vst [vmem:[#allocation5 + $0xf0] sm:$0xff] %v982
    %987 = vst [vmem:[#allocation5 + $0xf8] sm:$0xff] %v983
    %v988 = vld [vmem:[#allocation4 + $0x8] sm:$0xff]
    %v989 = vld [vmem:[#allocation4 + $0x10] sm:$0xff]
    %v990 = vld [vmem:[#allocation4 + $0x18] sm:$0xff]
    %v991 = vmul.f32 %v988, %v439
    %v992 = vmul.f32 %v989, %v442
    %v993 = vmul.f32 %v990, %v441
    %997 = vrot.lane.b32.xlu0 %v991, 111
    %v998 = vpop.permute.xlu0 %997
    %999 = vrot.lane.b32.xlu0 %v992, 111
    %v1000 = vpop.permute.xlu0 %999
    %1001 = vrot.lane.b32.xlu0 %v993, 111
    %v1002 = vpop.permute.xlu0 %1001
    %v1003 = vsel %vm103, %v998, %v1000
    %v1004 = vsel %vm103, %v1000, %v1002
    %1007 = vst [vmem:[#allocation5 + $0x100] sm:$0xff] %v1003
    %1008 = vst [vmem:[#allocation5 + $0x108] sm:$0xff] %v1004
    %v1009 = vld [vmem:[#allocation4 + $0x20] sm:$0xff]
    %v1010 = vld [vmem:[#allocation4 + $0x28] sm:$0xff]
    %v1011 = vld [vmem:[#allocation4 + $0x30] sm:$0xff]
    %v1012 = vmul.f32 %v1009, %v439
    %v1013 = vmul.f32 %v1010, %v442
    %v1014 = vmul.f32 %v1011, %v441
    %1018 = vrot.lane.b32.xlu0 %v1012, 111
    %v1019 = vpop.permute.xlu0 %1018
    %1020 = vrot.lane.b32.xlu0 %v1013, 111
    %v1021 = vpop.permute.xlu0 %1020
    %1022 = vrot.lane.b32.xlu0 %v1014, 111
    %v1023 = vpop.permute.xlu0 %1022
    %v1024 = vsel %vm103, %v1019, %v1021
    %v1025 = vsel %vm103, %v1021, %v1023
    %1028 = vst [vmem:[#allocation5 + $0x110] sm:$0xff] %v1024
    %1029 = vst [vmem:[#allocation5 + $0x118] sm:$0xff] %v1025
    %v1030 = vld [vmem:[#allocation5] sm:$0xff]
    %v1031 = vld [vmem:[#allocation5 + $0x8] sm:$0xff]
    %v1032 = vld [vmem:[#allocation5 + $0x10] sm:$0xff]
    %v1033 = vld [vmem:[#allocation5 + $0x18] sm:$0xff]
    %v1034 = vld [vmem:[#allocation5 + $0x20] sm:$0xff]
    %v1035 = vld [vmem:[#allocation5 + $0x28] sm:$0xff]
    %v1036 = vld [vmem:[#allocation5 + $0x30] sm:$0xff]
    %v1037 = vld [vmem:[#allocation5 + $0x38] sm:$0xff]
    %v1038 = vld [vmem:[#allocation5 + $0x40] sm:$0xff]
    %v1039 = vld [vmem:[#allocation5 + $0x48] sm:$0xff]
    %v1040 = vld [vmem:[#allocation5 + $0x50] sm:$0xff]
    %v1041 = vld [vmem:[#allocation5 + $0x58] sm:$0xff]
    %v1042 = vld [vmem:[#allocation5 + $0x60] sm:$0xff]
    %v1043 = vld [vmem:[#allocation5 + $0x68] sm:$0xff]
    %v1044 = vld [vmem:[#allocation5 + $0x70] sm:$0xff]
    %v1045 = vld [vmem:[#allocation5 + $0x78] sm:$0xff]
    %v1046 = vld [vmem:[#allocation5 + $0x80] sm:$0xff]
    %v1047 = vld [vmem:[#allocation5 + $0x88] sm:$0xff]
    %v1048 = vld [vmem:[#allocation5 + $0x90] sm:$0xff]
    %v1049 = vld [vmem:[#allocation5 + $0x98] sm:$0xff]
    %v1050 = vld [vmem:[#allocation5 + $0xa0] sm:$0xff]
    %v1051 = vld [vmem:[#allocation5 + $0xa8] sm:$0xff]
    %v1052 = vld [vmem:[#allocation5 + $0xb0] sm:$0xff]
    %v1053 = vld [vmem:[#allocation5 + $0xb8] sm:$0xff]
    %v1054 = vld [vmem:[#allocation5 + $0xc0] sm:$0xff]
    %v1055 = vld [vmem:[#allocation5 + $0xc8] sm:$0xff]
    %v1056 = vld [vmem:[#allocation5 + $0xd0] sm:$0xff]
    %v1057 = vld [vmem:[#allocation5 + $0xd8] sm:$0xff]
    %v1058 = vld [vmem:[#allocation5 + $0xe0] sm:$0xff]
    %v1059 = vld [vmem:[#allocation5 + $0xe8] sm:$0xff]
    %v1060 = vld [vmem:[#allocation5 + $0xf0] sm:$0xff]
    %v1061 = vld [vmem:[#allocation5 + $0xf8] sm:$0xff]
    %v1062 = vld [vmem:[#allocation5 + $0x100] sm:$0xff]
    %v1063 = vld [vmem:[#allocation5 + $0x108] sm:$0xff]
    %v1064 = vld [vmem:[#allocation5 + $0x110] sm:$0xff]
    %v1065 = vld [vmem:[#allocation5 + $0x118] sm:$0xff]
    %v1067 = vsel %vm521, %v694, 0
    %1069 = vmatprep.subr.mxu0 %v1031
    %1070 = vmatpush1.msra.mxu0 %v1030
    %1071 = vmatprep.subr.mxu0 %v1035
    %1072 = vmatpush1.msra.mxu0 %v1034
    %1073 = vmatprep.subr.mxu0 %v1039
    %1074 = vmatpush1.msra.mxu0 %v1038
    %1075 = vmatprep.subr.mxu0 %v1043
    %1076 = vmatpush1.msra.mxu0 %v1042
    %1077 = vmatprep.subr.mxu0 %v1047
    %1078 = vmatpush1.msra.mxu0 %v1046
    %1079 = vmatprep.subr.mxu0 %v1051
    %1080 = vmatpush1.msra.mxu0 %v1050
    %1081 = vmatprep.subr.mxu0 %v1055
    %1082 = vmatpush1.msra.mxu0 %v1054
    %1083 = vmatprep.subr.mxu0 %v1059
    %1084 = vmatpush1.msra.mxu0 %v1058
    %1085 = vmatprep.subr.mxu0 %v1063
    %1086 = vmatpush1.msra.mxu0 %v1062
    %1087 = vmatprep.subr.mxu0 0.0
    %1088 = vmatpush1.msra.mxu0 0.0
    %1089 = vmatprep.subr.mxu0 0.0
    %1090 = vmatpush1.msra.mxu0 0.0
    %1091 = vmatprep.subr.mxu0 0.0
    %1092 = vmatpush1.msra.mxu0 0.0
    %1093 = vmatprep.subr.mxu0 0.0
    %1094 = vmatpush1.msra.mxu0 0.0
    %1095 = vmatprep.subr.mxu0 0.0
    %1096 = vmatpush1.msra.mxu0 0.0
    %1097 = vmatprep.subr.mxu0 0.0
    %1098 = vmatpush1.msra.mxu0 0.0
    %1099 = vmatprep.subr.mxu0 0.0
    %1100 = vmatpush1.msra.mxu0 0.0
    %1101 = vmatprep.subr.mxu0 0.0
    %1102 = vmatpush1.msra.mxu0 0.0
    %1103 = vmatprep.subr.mxu0 0.0
    %1104 = vmatpush1.msra.mxu0 0.0
    %1105 = vmatprep.subr.mxu0 0.0
    %1106 = vmatpush1.msra.mxu0 0.0
    %1107 = vmatprep.subr.mxu0 0.0
    %1108 = vmatpush1.msra.mxu0 0.0
    %1109 = vmatprep.subr.mxu0 0.0
    %1110 = vmatpush1.msra.mxu0 0.0
    %1111 = vmatprep.subr.mxu0 0.0
    %1112 = vmatpush1.msra.mxu0 0.0
    %1113 = vmatprep.subr.mxu0 0.0
    %1114 = vmatpush1.msra.mxu0 0.0
    %1115 = vmatprep.subr.mxu0 0.0
    %1116 = vmatpush1.msra.mxu0 0.0
    %1117 = vmatprep.subr.mxu0 0.0
    %1118 = vmatpush1.msra.mxu0 0.0
    %1119 = vmatprep.subr.mxu0 0.0
    %1120 = vmatpush1.msra.mxu0 0.0
    %1121 = vmatprep.subr.mxu0 0.0
    %1122 = vmatpush1.msra.mxu0 0.0
    %1123 = vmatprep.subr.mxu0 0.0
    %1124 = vmatpush1.msra.mxu0 0.0
    %1125 = vmatprep.subr.mxu0 0.0
    %1126 = vmatpush1.msra.mxu0 0.0
    %1127 = vmatprep.subr.mxu0 0.0
    %1128 = vmatpush1.msra.mxu0 0.0
    %1129 = vmatprep.subr.mxu0 0.0
    %1130 = vmatpush1.msra.mxu0 0.0
    %1131 = vmatprep.subr.mxu0 0.0
    %1132 = vmatpush1.msra.mxu0 0.0
    %1133 = vmatprep.mubr.f32.mxu0 0.0
    %1134 = vmatmul.mubr.f32.gmra.mrb[0].mxu0 %v1067
    %v1135 = vpop.f32.mrb[0].mxu0
    %v1136 = vadd.f32 0.0, %v1135
    %v1137 = vpop.f32.mrb[0].mxu0
    %v1138 = vadd.f32 0.0, %v1137
    %1139 = vdwg.mxu0
    %1140 = vmatprep.subr.mxu0 %v1033
    %1141 = vmatpush1.msra.mxu0 %v1032
    %1142 = vmatprep.subr.mxu0 %v1037
    %1143 = vmatpush1.msra.mxu0 %v1036
    %1144 = vmatprep.subr.mxu0 %v1041
    %1145 = vmatpush1.msra.mxu0 %v1040
    %1146 = vmatprep.subr.mxu0 %v1045
    %1147 = vmatpush1.msra.mxu0 %v1044
    %1148 = vmatprep.subr.mxu0 %v1049
    %1149 = vmatpush1.msra.mxu0 %v1048
    %1150 = vmatprep.subr.mxu0 %v1053
    %1151 = vmatpush1.msra.mxu0 %v1052
    %1152 = vmatprep.subr.mxu0 %v1057
    %1153 = vmatpush1.msra.mxu0 %v1056
    %1154 = vmatprep.subr.mxu0 %v1061
    %1155 = vmatpush1.msra.mxu0 %v1060
    %1156 = vmatprep.subr.mxu0 %v1065
    %1157 = vmatpush1.msra.mxu0 %v1064
    %1158 = vmatprep.subr.mxu0 0.0
    %1159 = vmatpush1.msra.mxu0 0.0
    %1160 = vmatprep.subr.mxu0 0.0
    %1161 = vmatpush1.msra.mxu0 0.0
    %1162 = vmatprep.subr.mxu0 0.0
    %1163 = vmatpush1.msra.mxu0 0.0
    %1164 = vmatprep.subr.mxu0 0.0
    %1165 = vmatpush1.msra.mxu0 0.0
    %1166 = vmatprep.subr.mxu0 0.0
    %1167 = vmatpush1.msra.mxu0 0.0
    %1168 = vmatprep.subr.mxu0 0.0
    %1169 = vmatpush1.msra.mxu0 0.0
    %1170 = vmatprep.subr.mxu0 0.0
    %1171 = vmatpush1.msra.mxu0 0.0
    %1172 = vmatprep.subr.mxu0 0.0
    %1173 = vmatpush1.msra.mxu0 0.0
    %1174 = vmatprep.subr.mxu0 0.0
    %1175 = vmatpush1.msra.mxu0 0.0
    %1176 = vmatprep.subr.mxu0 0.0
    %1177 = vmatpush1.msra.mxu0 0.0
    %1178 = vmatprep.subr.mxu0 0.0
    %1179 = vmatpush1.msra.mxu0 0.0
    %1180 = vmatprep.subr.mxu0 0.0
    %1181 = vmatpush1.msra.mxu0 0.0
    %1182 = vmatprep.subr.mxu0 0.0
    %1183 = vmatpush1.msra.mxu0 0.0
    %1184 = vmatprep.subr.mxu0 0.0
    %1185 = vmatpush1.msra.mxu0 0.0
    %1186 = vmatprep.subr.mxu0 0.0
    %1187 = vmatpush1.msra.mxu0 0.0
    %1188 = vmatprep.subr.mxu0 0.0
    %1189 = vmatpush1.msra.mxu0 0.0
    %1190 = vmatprep.subr.mxu0 0.0
    %1191 = vmatpush1.msra.mxu0 0.0
    %1192 = vmatprep.subr.mxu0 0.0
    %1193 = vmatpush1.msra.mxu0 0.0
    %1194 = vmatprep.subr.mxu0 0.0
    %1195 = vmatpush1.msra.mxu0 0.0
    %1196 = vmatprep.subr.mxu0 0.0
    %1197 = vmatpush1.msra.mxu0 0.0
    %1198 = vmatprep.subr.mxu0 0.0
    %1199 = vmatpush1.msra.mxu0 0.0
    %1200 = vmatprep.subr.mxu0 0.0
    %1201 = vmatpush1.msra.mxu0 0.0
    %1202 = vmatprep.subr.mxu0 0.0
    %1203 = vmatpush1.msra.mxu0 0.0
    %1204 = vmatprep.mubr.f32.mxu0 0.0
    %1205 = vmatmul.mubr.f32.gmra.mrb[0].mxu0 %v1067
    %v1206 = vpop.f32.mrb[0].mxu0
    %v1207 = vadd.f32 0.0, %v1206
    %v1208 = vpop.f32.mrb[0].mxu0
    %v1209 = vadd.f32 0.0, %v1208
    %1210 = vdwg.mxu0
    %v1211 = vadd.f32 %v601, %v1136
    %v1212 = vadd.f32 %v603, %v1138
    %v1213 = vadd.f32 %v678, %v1207
    %v1214 = vadd.f32 %v680, %v1209
    %1215 = vset.pattern.permute.xlu0 3
    %1216 = vperm.xlu0 %1215, %v48
    %v1217 = vpop.permute.xlu0 %1216
    %v1219 = vadd.f32 %v1211, %v1217
    %v1220 = vadd.f32 %v1212, %v1217
    %v1221 = vadd.f32 %v1213, %v1217
    %v1222 = vadd.f32 %v1214, %v1217
    %1223 = vst [vmem:[#allocation11] sm:$0xff] %v1219
    %1224 = vst [vmem:[#allocation11 + $0x8] sm:$0xff] %v1220
    %1225 = vst [vmem:[#allocation11 + $0x10] sm:$0xff] %v1221
    %1226 = vst [vmem:[#allocation11 + $0x18] sm:$0xff] %v1222
    // Predicated region
    $region30: #{tpu_custom_call.1} parent=1 // pred_check
      _
    $region31: #{tpu_custom_call.1} parent=1 // pred_check_branch
      %1228 = sbr.rel (0) target = $region33
    $region32: #{tpu_custom_call.1} parent=1 // pred_region
      %s1230 = ssub.s32 512, 512
      %1231 = vsyncadd [#allocation8], %s1230
      %s1233 = sshll.u32 [#allocation11], 4
      %s1234 = int_to_ptr.vmem [resolvable:$true] %s1233
      %1236 = dma.vmem_to_hbm [thread:$0]  %s1234, 512, %s5, [#allocation8]
    $region33: #{tpu_custom_call.1} parent=1 // pred_fallthru
      _
    // Predicated region
    $region34: #{tpu_custom_call.1} parent=1 // pred_check
      _
    $region35: #{tpu_custom_call.1} parent=1 // pred_check_branch
      %1238 = sbr.rel (0) target = $region37
    $region36: #{tpu_custom_call.1} parent=1 // pred_region
      %1239 = dma.done [#allocation8], 512
    $region37: #{tpu_custom_call.1} parent=1 // pred_fallthru
      _
    %1240 = vsyncpa [#allocation7], 1
    %1241 = vsyncpa [#allocation10], 1
    %1242 = vsyncpa [#allocation8], 1

</llo_original>
